<compile_context>
chip_gen: v7x
topology: tpu7x:2x2x1
jax: 0.10.0
libtpu: 0.0.40
codegen_flags: <defaults>
</compile_context>

<pallas_src>
import jax
import jax.numpy as jnp
import numpy as np
from jax.experimental import pallas as pl
from jax.experimental.pallas import tpu as pltpu

LEAKY_SLOPE = 0.01      # F.leaky_relu default
LANE_PAD = 128          # lane-dense padded output width (true N = 1)


def _round_up(x, m):
    return (x + m - 1) // m * m


def _cdiv(a, b):
    return (a + b - 1) // b


# ----------------------------------------------------------------------------
# Pallas kernel: fused  leaky_relu([x|y] @ W1 + b1) @ W2 + b2
# ----------------------------------------------------------------------------
def _mine_kernel(xy_ref, w1_ref, b1_ref, w2_ref, b2_ref, o_ref):
    z = jnp.dot(xy_ref[...], w1_ref[...], preferred_element_type=jnp.float32)
    z = z + b1_ref[...]
    h1 = jnp.where(z > 0, z, LEAKY_SLOPE * z)
    h1 = h1.astype(w2_ref.dtype)
    o_ref[...] = (jnp.dot(h1, w2_ref[...], preferred_element_type=jnp.float32)
                  + b2_ref[...]).astype(o_ref.dtype)


# ----------------------------------------------------------------------------
# One-time parameter preparation (hoisted out of the per-call path)
# ----------------------------------------------------------------------------
def prepare_params(params, compute_dtype=jnp.float32):
    """Pre-transpose / stack / lane-pad the weights once.

    Returns a pytree consumed directly by mine_forward. compute_dtype=bfloat16
    enables the bf16-input MXU path (f32 accumulation) on v6e/v7x.
    """
    H = params['fc1_x_w'].shape[0]                                       # 512
    # Stacked fc1 weight: [W1x ; W1y] laid out as (2K, H) so [x|y] @ W1 works.
    w1 = jnp.concatenate([params['fc1_x_w'], params['fc1_y_w']], axis=1)  # (H, 2K)
    w1 = jnp.transpose(w1).astype(compute_dtype)                          # (2K, H)
    b1 = (params['fc1_x_b'] + params['fc1_y_b'])[None, :].astype(jnp.float32)   # (1, H)
    w2 = jnp.zeros((H, LANE_PAD), compute_dtype).at[:, :1].set(
        jnp.transpose(params['fc2_w']).astype(compute_dtype))             # (H, 128)
    b2 = jnp.zeros((1, LANE_PAD), jnp.float32).at[:, :1].set(
        params['fc2_b'][None, :].astype(jnp.float32))                     # (1, 128)
    return {'w1': w1, 'b1': b1, 'w2': w2, 'b2': b2}


# ----------------------------------------------------------------------------
# Forward wrapper
# ----------------------------------------------------------------------------
def mine_forward(prepared, x, y):
    """x, y: (B, 800) -> (B, 1) float32."""
    B = x.shape[0]
    w1, b1, w2, b2 = prepared['w1'], prepared['b1'], prepared['w2'], prepared['b2']
    K2, H = w1.shape                                   # 1600, 512
    NP = w2.shape[1]                                   # 128 (lane-dense)
    cdt = w1.dtype
    row_align = 16 if cdt == jnp.bfloat16 else 8

    # Balanced M tiling (target ~512 rows/tile); force >=2 grid steps when the
    # batch permits so both v7x TensorCores get work (no-op on v5e/v6e).
    n_tiles = max(_cdiv(B, 512), 1)
    if n_tiles < 2 and B >= 2 * row_align:
        n_tiles = 2
    tm = _round_up(_cdiv(B, n_tiles), row_align)
    Mp = n_tiles * tm

    # Single concatenated activation buffer [x | y]; pad the ragged tail only
    # (no full zero-fill round trip when B is already tile-aligned).
    xy = jnp.concatenate([x, y], axis=1).astype(cdt)          # (B, 1600)
    if Mp != B:
        xy = jnp.pad(xy, ((0, Mp - B), (0, 0)))

    resident = dict(pipeline_mode=pl.Buffered(1))   # constant index -> single buffer
    out = pl.pallas_call(
        _mine_kernel,
        out_shape=jax.ShapeDtypeStruct((Mp, NP), jnp.float32),
        grid=(n_tiles,),
        in_specs=[
            pl.BlockSpec((tm, K2), lambda i: (i, 0)),              # [x|y] tile
            pl.BlockSpec((K2, H), lambda i: (0, 0), **resident),   # stacked W1
            pl.BlockSpec((1, H), lambda i: (0, 0), **resident),    # fused bias b1
            pl.BlockSpec((H, NP), lambda i: (0, 0), **resident),   # W2 (lane-padded)
            pl.BlockSpec((1, NP), lambda i: (0, 0), **resident),   # b2 (lane-padded)
        ],
        out_specs=pl.BlockSpec((tm, NP), lambda i: (i, 0)),
        compiler_params=pltpu.CompilerParams(
            dimension_semantics=("parallel",),
            vmem_limit_bytes=32 * 1024 * 1024),
    )(xy, w1, b1, w2, b2)

    return out[:B, :1]


# ----------------------------------------------------------------------------
# Parameters (PyTorch nn.Linear default init) and pure-JAX reference
# ----------------------------------------------------------------------------
def init_params(key):
    ks = jax.random.split(key, 6)

    def u(k, shape, fan_in):
        bound = 1.0 / jnp.sqrt(float(fan_in))
        return jax.random.uniform(k, shape, jnp.float32, -bound, bound)

    in_dim = 50 * 4 * 4   # 800
    hidden = 512
    return {
        'fc1_x_w': u(ks[0], (hidden, in_dim), in_dim),
        'fc1_x_b': u(ks[1], (hidden,), in_dim),
        'fc1_y_w': u(ks[2], (hidden, in_dim), in_dim),
        'fc1_y_b': u(ks[3], (hidden,), in_dim),
        'fc2_w': u(ks[4], (1, hidden), hidden),
        'fc2_b': u(ks[5], (1,), hidden),
    }


def ref_forward(params, x, y):
    z = (x @ params['fc1_x_w'].T + params['fc1_x_b']
         + y @ params['fc1_y_w'].T + params['fc1_y_b'])
    h1 = jnp.where(z > 0, z, LEAKY_SLOPE * z)
    return h1 @ params['fc2_w'].T + params['fc2_b']


# ----------------------------------------------------------------------------
if __name__ == "__main__":
    key = jax.random.PRNGKey(0)
    pkey, xkey, ykey = jax.random.split(key, 3)
    params = init_params(pkey)

    in_dim = 50 * 4 * 4
    fwd = jax.jit(mine_forward)

    # Case 1: tiny batch (f32 path).
    B = 2
    x = jax.random.normal(xkey, (B, in_dim), jnp.float32)
    y = jax.random.normal(ykey, (B, in_dim), jnp.float32)
    prepared_f32 = prepare_params(params)
    out = jax.block_until_ready(fwd(prepared_f32, x, y))
    assert out.shape == (B, 1)
    assert bool(jnp.all(jnp.isfinite(out)))
    np.testing.assert_allclose(np.asarray(out),
                               np.asarray(ref_forward(params, x, y)),
                               rtol=1e-4, atol=1e-4)

    # Case 2: ragged batch -> balanced 2-step grid (exercises tail padding and
    # the multi-step "parallel" grid used for v7x megacore).
    B2 = 24
    x2 = jax.random.normal(jax.random.PRNGKey(1), (B2, in_dim), jnp.float32)
    y2 = jax.random.normal(jax.random.PRNGKey(2), (B2, in_dim), jnp.float32)
    out2 = jax.block_until_ready(fwd(prepared_f32, x2, y2))
    np.testing.assert_allclose(np.asarray(out2),
                               np.asarray(ref_forward(params, x2, y2)),
                               rtol=1e-4, atol=1e-4)

    # Case 3: optional bf16 MXU-input mode (f32 accumulation), loose tolerance.
    prepared_bf16 = prepare_params(params, compute_dtype=jnp.bfloat16)
    out3 = jax.block_until_ready(fwd(prepared_bf16, x2, y2))
    assert bool(jnp.all(jnp.isfinite(out3)))
    np.testing.assert_allclose(np.asarray(out3),
                               np.asarray(ref_forward(params, x2, y2)),
                               rtol=1e-1, atol=1e-1)

    print("KERNEL_OK")
</pallas_src>

<mosaic_0001>
module attributes {stable_mosaic.version = 11 : i64} {
  func.func @_mine_kernel(%arg0: i32, %arg1: memref<8x1600xf32, #tpu.memory_space<vmem>>, %arg2: memref<1600x512xf32, #tpu.memory_space<vmem>>, %arg3: memref<1x512xf32, #tpu.memory_space<vmem>>, %arg4: memref<512x128xf32, #tpu.memory_space<vmem>>, %arg5: memref<1x128xf32, #tpu.memory_space<vmem>>, %arg6: memref<8x128xf32, #tpu.memory_space<vmem>>) attributes {dimension_semantics = [#tpu.dimension_semantics<parallel>], iteration_bounds = array<i64: 1>, scalar_prefetch = 0 : i64, scratch_operands = 0 : i64, tpu.core_type = #tpu.core_type<tc>, window_params = [{transform_indices = @transform_0, window_bounds = array<i64: 8, 1600>}, {pipeline_mode = #tpu.pipeline_mode<synchronous>, transform_indices = @transform_1, window_bounds = array<i64: 1600, 512>}, {pipeline_mode = #tpu.pipeline_mode<synchronous>, transform_indices = @transform_2, window_bounds = array<i64: 1, 512>}, {pipeline_mode = #tpu.pipeline_mode<synchronous>, transform_indices = @transform_3, window_bounds = array<i64: 512, 128>}, {pipeline_mode = #tpu.pipeline_mode<synchronous>, transform_indices = @transform_4, window_bounds = array<i64: 1, 128>}, {transform_indices = @transform_5, window_bounds = array<i64: 8, 128>}]} {
    %c0 = arith.constant 0 : index
    %c0_0 = arith.constant 0 : index
    %0 = vector.load %arg1[%c0, %c0_0] : memref<8x1600xf32, #tpu.memory_space<vmem>>, vector<8x1600xf32>
    %c0_1 = arith.constant 0 : index
    %c0_2 = arith.constant 0 : index
    %1 = vector.load %arg2[%c0_1, %c0_2] : memref<1600x512xf32, #tpu.memory_space<vmem>>, vector<1600x512xf32>
    %cst = arith.constant dense<0.000000e+00> : vector<8x512xf32>
    %2 = tpu.matmul %0, %1, %cst {dimension_numbers = #tpu.dot_dimension_numbers<[1], [0], [0], [1], [0, 0, 1, 1], [], []>} : vector<8x1600xf32>, vector<1600x512xf32>, vector<8x512xf32> -> vector<8x512xf32>
    %c0_3 = arith.constant 0 : index
    %c0_4 = arith.constant 0 : index
    %3 = vector.load %arg3[%c0_3, %c0_4] : memref<1x512xf32, #tpu.memory_space<vmem>>, vector<1x512xf32>
    %4 = vector.broadcast %3 : vector<1x512xf32> to vector<8x512xf32>
    %5 = arith.addf %2, %4 : vector<8x512xf32>
    %cst_5 = arith.constant 0.000000e+00 : f32
    %6 = vector.broadcast %cst_5 : f32 to vector<8x512xf32>
    %7 = arith.cmpf ogt, %5, %6 : vector<8x512xf32>
    %cst_6 = arith.constant 0.00999999977 : f32
    %8 = vector.broadcast %cst_6 : f32 to vector<8x512xf32>
    %9 = arith.mulf %8, %5 : vector<8x512xf32>
    %10 = arith.select %7, %5, %9 : vector<8x512xi1>, vector<8x512xf32>
    %c0_7 = arith.constant 0 : index
    %c0_8 = arith.constant 0 : index
    %11 = vector.load %arg4[%c0_7, %c0_8] : memref<512x128xf32, #tpu.memory_space<vmem>>, vector<512x128xf32>
    %cst_9 = arith.constant dense<0.000000e+00> : vector<8x128xf32>
    %12 = tpu.matmul %10, %11, %cst_9 {dimension_numbers = #tpu.dot_dimension_numbers<[1], [0], [0], [1], [0, 0, 1, 1], [], []>} : vector<8x512xf32>, vector<512x128xf32>, vector<8x128xf32> -> vector<8x128xf32>
    %c0_10 = arith.constant 0 : index
    %c0_11 = arith.constant 0 : index
    %13 = vector.load %arg5[%c0_10, %c0_11] : memref<1x128xf32, #tpu.memory_space<vmem>>, vector<1x128xf32>
    %14 = vector.broadcast %13 : vector<1x128xf32> to vector<8x128xf32>
    %15 = arith.addf %12, %14 : vector<8x128xf32>
    %c0_12 = arith.constant 0 : index
    %c0_13 = arith.constant 0 : index
    %16 = vector.load %arg6[%c0_12, %c0_13] : memref<8x128xf32, #tpu.memory_space<vmem>>, vector<8x128xf32>
    tpu.vector_store %arg6[%c0_12, %c0_13], %15 {strides = array<i32>} : memref<8x128xf32, #tpu.memory_space<vmem>>, vector<8x128xf32>,
    return
  }
  func.func @transform_0(%arg0: i32) -> (i32, i32) {
    %c0_i32 = arith.constant 0 : i32
    %c0_i32_0 = arith.constant 0 : i32
    return %arg0, %c0_i32 : i32, i32
  }
  func.func @transform_1(%arg0: i32) -> (i32, i32) {
    %c0_i32 = arith.constant 0 : i32
    %c0_i32_0 = arith.constant 0 : i32
    %c0_i32_1 = arith.constant 0 : i32
    return %c0_i32, %c0_i32_0 : i32, i32
  }
  func.func @transform_2(%arg0: i32) -> (i32, i32) {
    %c0_i32 = arith.constant 0 : i32
    %c0_i32_0 = arith.constant 0 : i32
    %c0_i32_1 = arith.constant 0 : i32
    return %c0_i32, %c0_i32_0 : i32, i32
  }
  func.func @transform_3(%arg0: i32) -> (i32, i32) {
    %c0_i32 = arith.constant 0 : i32
    %c0_i32_0 = arith.constant 0 : i32
    %c0_i32_1 = arith.constant 0 : i32
    return %c0_i32, %c0_i32_0 : i32, i32
  }
  func.func @transform_4(%arg0: i32) -> (i32, i32) {
    %c0_i32 = arith.constant 0 : i32
    %c0_i32_0 = arith.constant 0 : i32
    %c0_i32_1 = arith.constant 0 : i32
    return %c0_i32, %c0_i32_0 : i32, i32
  }
  func.func @transform_5(%arg0: i32) -> (i32, i32) {
    %c0_i32 = arith.constant 0 : i32
    %c0_i32_0 = arith.constant 0 : i32
    return %arg0, %c0_i32 : i32, i32
  }
}

</mosaic_0001>

<llo_original>
// kernel: mine_forward.1
$region0: #{mine_forward.1}
  #allocation0 [shape = 'u32[]', space=smem, size = 0x4, offset = 0x4, fixed_abs, tag = 'smem constant byte address 0x4 - core index']
  #allocation1 [shape = 'u32[144,128]{1,0:T(1,128)}', space=vmem, size = 0x12000, scoped, tag = 'internal scratch']
  %s0 = inlined_call_operand.vmem [shape: f32[8,1600], index: 0, kind: input, shape index: {}]
  %s1 = inlined_call_operand.hbm [shape: f32[1600,512], index: 1, kind: input, shape index: {}]
  %s2 = inlined_call_operand.hbm [shape: f32[1,512], index: 2, kind: input, shape index: {}]
  %s3 = inlined_call_operand.hbm [shape: f32[512,128], index: 3, kind: input, shape index: {}]
  %s4 = inlined_call_operand.hbm [shape: f32[1,128], index: 4, kind: input, shape index: {}]
  %s5 = inlined_call_operand.vmem [shape: f32[8,128], index: 5, kind: output, shape index: {}]
  %s6 = sld [smem:[#allocation0]]
  $region46: #{mine_forward.1} parent=0
    _
  %s8 = ssub.s32 1, %s6
  %s9 = scalar_select 0, %s8, %s6
  $region1: #{mine_forward.1} parent=0
    #allocation2 [shape = 'u8[3276800]{0}', space=vmem, size = 0x320000, scoped, tag = 'input window, operand 1, single buffered']
    #allocation3 [shape = 's32[1]{0}', space=sflag, size = 0x4, scoped, tag = 'scoped memory for mine_forward.1']
    #allocation4 [shape = 'u8[2048]{0}', space=vmem, size = 0x800, scoped, tag = 'input window, operand 2, single buffered']
    #allocation5 [shape = 's32[1]{0}', space=sflag, size = 0x4, scoped, tag = 'scoped memory for mine_forward.1']
    #allocation6 [shape = 'u8[262144]{0}', space=vmem, size = 0x40000, scoped, tag = 'input window, operand 3, single buffered']
    #allocation7 [shape = 'u8[512]{0}', space=vmem, size = 0x400, scoped, tag = 'input window, operand 4, single buffered']
    #allocation8 [shape = 's32[1]{0}', space=sflag, size = 0x4, scoped, tag = 'scoped memory for mine_forward.1']
    %10 = vsyncpa [#allocation3], 0
    %11 = vsyncpa [#allocation5], 0
    %12 = vsyncpa [#allocation8], 0
    // Predicated region
    $region2: #{mine_forward.1} parent=1 // pred_check
      _
    $region3: #{mine_forward.1} parent=1 // pred_check_branch
      %14 = sbr.rel (0) target = $region5
    $region4: #{mine_forward.1} parent=1 // pred_region
      _
    $region5: #{mine_forward.1} parent=1 // pred_fallthru
      _
    // Predicated region
    $region6: #{mine_forward.1} parent=1 // pred_check
      _
    $region7: #{mine_forward.1} parent=1 // pred_check_branch
      %16 = sbr.rel (0) target = $region9
    $region8: #{mine_forward.1} parent=1 // pred_region
      %s18 = ssub.s32 102400, 102400
      %19 = vsyncadd [#allocation3], %s18
      %s20 = sshll.u32 [#allocation2], 4
      %s21 = int_to_ptr.vmem [resolvable:$true] %s20
      %26 = dma.hbm_to_vmem [thread:$0]  %s1, 102400, %s21, [#allocation3], 512, 512, 32
    $region9: #{mine_forward.1} parent=1 // pred_fallthru
      _
    // Predicated region
    $region10: #{mine_forward.1} parent=1 // pred_check
      _
    $region11: #{mine_forward.1} parent=1 // pred_check_branch
      %28 = sbr.rel (0) target = $region13
    $region12: #{mine_forward.1} parent=1 // pred_region
      %s30 = ssub.s32 64, 64
      %31 = vsyncadd [#allocation5], %s30
      %s33 = sshll.u32 [#allocation4], 4
      %s34 = int_to_ptr.vmem [resolvable:$true] %s33
      %36 = dma.hbm_to_vmem [thread:$0]  %s2, 64, %s34, [#allocation5]
    $region13: #{mine_forward.1} parent=1 // pred_fallthru
      _
    // Predicated region
    $region14: #{mine_forward.1} parent=1 // pred_check
      _
    $region15: #{mine_forward.1} parent=1 // pred_check_branch
      %38 = sbr.rel (0) target = $region17
    $region16: #{mine_forward.1} parent=1 // pred_region
      %s40 = ssub.s32 8192, 8192
      %41 = vsyncadd [#allocation5], %s40
      %s42 = sshll.u32 [#allocation6], 4
      %s43 = int_to_ptr.vmem [resolvable:$true] %s42
      %48 = dma.hbm_to_vmem [thread:$0]  %s3, 8192, %s43, [#allocation5], 128, 128, 8
    $region17: #{mine_forward.1} parent=1 // pred_fallthru
      _
    // Predicated region
    $region18: #{mine_forward.1} parent=1 // pred_check
      _
    $region19: #{mine_forward.1} parent=1 // pred_check_branch
      %50 = sbr.rel (0) target = $region21
    $region20: #{mine_forward.1} parent=1 // pred_region
      %s52 = ssub.s32 16, 16
      %53 = vsyncadd [#allocation8], %s52
      %s55 = sshll.u32 [#allocation7], 4
      %s56 = int_to_ptr.vmem [resolvable:$true] %s55
      %58 = dma.hbm_to_vmem [thread:$0]  %s4, 16, %s56, [#allocation8]
    $region21: #{mine_forward.1} parent=1 // pred_fallthru
      _
    // Predicated region
    $region22: #{mine_forward.1} parent=1 // pred_check
      _
    $region23: #{mine_forward.1} parent=1 // pred_check_branch
      %60 = sbr.rel (0) target = $region25
    $region24: #{mine_forward.1} parent=1 // pred_region
      %61 = dma.done [#allocation3], 102400
    $region25: #{mine_forward.1} parent=1 // pred_fallthru
      _
    // Predicated region
    $region26: #{mine_forward.1} parent=1 // pred_check
      _
    $region27: #{mine_forward.1} parent=1 // pred_check_branch
      %63 = sbr.rel (0) target = $region29
    $region28: #{mine_forward.1} parent=1 // pred_region
      %64 = dma.done [#allocation5], 64
    $region29: #{mine_forward.1} parent=1 // pred_fallthru
      _
    // Predicated region
    $region30: #{mine_forward.1} parent=1 // pred_check
      _
    $region31: #{mine_forward.1} parent=1 // pred_check_branch
      %66 = sbr.rel (0) target = $region33
    $region32: #{mine_forward.1} parent=1 // pred_region
      %67 = dma.done [#allocation5], 8192
    $region33: #{mine_forward.1} parent=1 // pred_fallthru
      _
    // Predicated region
    $region34: #{mine_forward.1} parent=1 // pred_check
      _
    $region35: #{mine_forward.1} parent=1 // pred_check_branch
      %69 = sbr.rel (0) target = $region37
    $region36: #{mine_forward.1} parent=1 // pred_region
      %70 = dma.done [#allocation8], 16
    $region37: #{mine_forward.1} parent=1 // pred_fallthru
      _
    %v71 = vld [vmem:[%s0] sm:$0xff]
    %v72 = vld [vmem:[%s0 + $0x8] sm:$0xff]
    %v73 = vld [vmem:[%s0 + $0x10] sm:$0xff]
    %v74 = vld [vmem:[%s0 + $0x18] sm:$0xff]
    %v75 = vld [vmem:[%s0 + $0x20] sm:$0xff]
    %v76 = vld [vmem:[%s0 + $0x28] sm:$0xff]
    %v77 = vld [vmem:[%s0 + $0x30] sm:$0xff]
    %v78 = vld [vmem:[%s0 + $0x38] sm:$0xff]
    %v79 = vld [vmem:[%s0 + $0x40] sm:$0xff]
    %v80 = vld [vmem:[%s0 + $0x48] sm:$0xff]
    %v81 = vld [vmem:[%s0 + $0x50] sm:$0xff]
    %v82 = vld [vmem:[%s0 + $0x58] sm:$0xff]
    %v83 = vld [vmem:[%s0 + $0x60] sm:$0xff]
    %v84 = vld [vmem:[#allocation2] sm:$0xff]
    %v85 = vld [vmem:[#allocation2 + $0x8] sm:$0xff]
    %v86 = vld [vmem:[#allocation2 + $0x10] sm:$0xff]
    %v87 = vld [vmem:[#allocation2 + $0x18] sm:$0xff]
    %v88 = vld [vmem:[#allocation2 + $0x20] sm:$0xff]
    %v89 = vld [vmem:[#allocation2 + $0x28] sm:$0xff]
    %v90 = vld [vmem:[#allocation2 + $0x30] sm:$0xff]
    %v91 = vld [vmem:[#allocation2 + $0x38] sm:$0xff]
    %v92 = vld [vmem:[#allocation2 + $0x40] sm:$0xff]
    %v93 = vld [vmem:[#allocation2 + $0x48] sm:$0xff]
    %v94 = vld [vmem:[#allocation2 + $0x50] sm:$0xff]
    %v95 = vld [vmem:[#allocation2 + $0x58] sm:$0xff]
    %v96 = vld [vmem:[#allocation2 + $0x60] sm:$0xff]
    %v97 = vld [vmem:[#allocation2 + $0x68] sm:$0xff]
    %v98 = vld [vmem:[#allocation2 + $0x70] sm:$0xff]
    %v99 = vld [vmem:[#allocation2 + $0x78] sm:$0xff]
    %v100 = vld [vmem:[#allocation2 + $0x80] sm:$0xff]
    %v101 = vld [vmem:[#allocation2 + $0x88] sm:$0xff]
    %v102 = vld [vmem:[#allocation2 + $0x90] sm:$0xff]
    %v103 = vld [vmem:[#allocation2 + $0x98] sm:$0xff]
    %v104 = vld [vmem:[#allocation2 + $0xa0] sm:$0xff]
    %v105 = vld [vmem:[#allocation2 + $0xa8] sm:$0xff]
    %v106 = vld [vmem:[#allocation2 + $0xb0] sm:$0xff]
    %v107 = vld [vmem:[#allocation2 + $0xb8] sm:$0xff]
    %v108 = vld [vmem:[#allocation2 + $0xc0] sm:$0xff]
    %v109 = vld [vmem:[#allocation2 + $0xc8] sm:$0xff]
    %v110 = vld [vmem:[#allocation2 + $0xd0] sm:$0xff]
    %v111 = vld [vmem:[#allocation2 + $0xd8] sm:$0xff]
    %v112 = vld [vmem:[#allocation2 + $0xe0] sm:$0xff]
    %v113 = vld [vmem:[#allocation2 + $0xe8] sm:$0xff]
    %v114 = vld [vmem:[#allocation2 + $0xf0] sm:$0xff]
    %v115 = vld [vmem:[#allocation2 + $0xf8] sm:$0xff]
    %v116 = vld [vmem:[#allocation2 + $0x100] sm:$0xff]
    %v117 = vld [vmem:[#allocation2 + $0x108] sm:$0xff]
    %v118 = vld [vmem:[#allocation2 + $0x110] sm:$0xff]
    %v119 = vld [vmem:[#allocation2 + $0x118] sm:$0xff]
    %v120 = vld [vmem:[#allocation2 + $0x120] sm:$0xff]
    %v121 = vld [vmem:[#allocation2 + $0x128] sm:$0xff]
    %v122 = vld [vmem:[#allocation2 + $0x130] sm:$0xff]
    %v123 = vld [vmem:[#allocation2 + $0x138] sm:$0xff]
    %v124 = vld [vmem:[#allocation2 + $0x140] sm:$0xff]
    %v125 = vld [vmem:[#allocation2 + $0x148] sm:$0xff]
    %v126 = vld [vmem:[#allocation2 + $0x150] sm:$0xff]
    %v127 = vld [vmem:[#allocation2 + $0x158] sm:$0xff]
    %v128 = vld [vmem:[#allocation2 + $0x160] sm:$0xff]
    %v129 = vld [vmem:[#allocation2 + $0x168] sm:$0xff]
    %v130 = vld [vmem:[#allocation2 + $0x170] sm:$0xff]
    %v131 = vld [vmem:[#allocation2 + $0x178] sm:$0xff]
    %v132 = vld [vmem:[#allocation2 + $0x180] sm:$0xff]
    %v133 = vld [vmem:[#allocation2 + $0x188] sm:$0xff]
    %v134 = vld [vmem:[#allocation2 + $0x190] sm:$0xff]
    %v135 = vld [vmem:[#allocation2 + $0x198] sm:$0xff]
    %v136 = vld [vmem:[#allocation2 + $0x1a0] sm:$0xff]
    %v137 = vld [vmem:[#allocation2 + $0x1a8] sm:$0xff]
    %v138 = vld [vmem:[#allocation2 + $0x1b0] sm:$0xff]
    %v139 = vld [vmem:[#allocation2 + $0x1b8] sm:$0xff]
    %v140 = vld [vmem:[#allocation2 + $0x1c0] sm:$0xff]
    %v141 = vld [vmem:[#allocation2 + $0x1c8] sm:$0xff]
    %v142 = vld [vmem:[#allocation2 + $0x1d0] sm:$0xff]
    %v143 = vld [vmem:[#allocation2 + $0x1d8] sm:$0xff]
    %v144 = vld [vmem:[#allocation2 + $0x1e0] sm:$0xff]
    %v145 = vld [vmem:[#allocation2 + $0x1e8] sm:$0xff]
    %v146 = vld [vmem:[#allocation2 + $0x1f0] sm:$0xff]
    %v147 = vld [vmem:[#allocation2 + $0x1f8] sm:$0xff]
    %v148 = vld [vmem:[#allocation2 + $0x200] sm:$0xff]
    %v149 = vld [vmem:[#allocation2 + $0x208] sm:$0xff]
    %v150 = vld [vmem:[#allocation2 + $0x210] sm:$0xff]
    %v151 = vld [vmem:[#allocation2 + $0x218] sm:$0xff]
    %v152 = vld [vmem:[#allocation2 + $0x220] sm:$0xff]
    %v153 = vld [vmem:[#allocation2 + $0x228] sm:$0xff]
    %v154 = vld [vmem:[#allocation2 + $0x230] sm:$0xff]
    %v155 = vld [vmem:[#allocation2 + $0x238] sm:$0xff]
    %v156 = vld [vmem:[#allocation2 + $0x240] sm:$0xff]
    %v157 = vld [vmem:[#allocation2 + $0x248] sm:$0xff]
    %v158 = vld [vmem:[#allocation2 + $0x250] sm:$0xff]
    %v159 = vld [vmem:[#allocation2 + $0x258] sm:$0xff]
    %v160 = vld [vmem:[#allocation2 + $0x260] sm:$0xff]
    %v161 = vld [vmem:[#allocation2 + $0x268] sm:$0xff]
    %v162 = vld [vmem:[#allocation2 + $0x270] sm:$0xff]
    %v163 = vld [vmem:[#allocation2 + $0x278] sm:$0xff]
    %v164 = vld [vmem:[#allocation2 + $0x280] sm:$0xff]
    %v165 = vld [vmem:[#allocation2 + $0x288] sm:$0xff]
    %v166 = vld [vmem:[#allocation2 + $0x290] sm:$0xff]
    %v167 = vld [vmem:[#allocation2 + $0x298] sm:$0xff]
    %v168 = vld [vmem:[#allocation2 + $0x2a0] sm:$0xff]
    %v169 = vld [vmem:[#allocation2 + $0x2a8] sm:$0xff]
    %v170 = vld [vmem:[#allocation2 + $0x2b0] sm:$0xff]
    %v171 = vld [vmem:[#allocation2 + $0x2b8] sm:$0xff]
    %v172 = vld [vmem:[#allocation2 + $0x2c0] sm:$0xff]
    %v173 = vld [vmem:[#allocation2 + $0x2c8] sm:$0xff]
    %v174 = vld [vmem:[#allocation2 + $0x2d0] sm:$0xff]
    %v175 = vld [vmem:[#allocation2 + $0x2d8] sm:$0xff]
    %v176 = vld [vmem:[#allocation2 + $0x2e0] sm:$0xff]
    %v177 = vld [vmem:[#allocation2 + $0x2e8] sm:$0xff]
    %v178 = vld [vmem:[#allocation2 + $0x2f0] sm:$0xff]
    %v179 = vld [vmem:[#allocation2 + $0x2f8] sm:$0xff]
    %v180 = vld [vmem:[#allocation2 + $0x300] sm:$0xff]
    %v181 = vld [vmem:[#allocation2 + $0x308] sm:$0xff]
    %v182 = vld [vmem:[#allocation2 + $0x310] sm:$0xff]
    %v183 = vld [vmem:[#allocation2 + $0x318] sm:$0xff]
    %v184 = vld [vmem:[#allocation2 + $0x320] sm:$0xff]
    %v185 = vld [vmem:[#allocation2 + $0x328] sm:$0xff]
    %v186 = vld [vmem:[#allocation2 + $0x330] sm:$0xff]
    %v187 = vld [vmem:[#allocation2 + $0x338] sm:$0xff]
    %v188 = vld [vmem:[#allocation2 + $0x340] sm:$0xff]
    %v189 = vld [vmem:[#allocation2 + $0x348] sm:$0xff]
    %v190 = vld [vmem:[#allocation2 + $0x350] sm:$0xff]
    %v191 = vld [vmem:[#allocation2 + $0x358] sm:$0xff]
    %v192 = vld [vmem:[#allocation2 + $0x360] sm:$0xff]
    %v193 = vld [vmem:[#allocation2 + $0x368] sm:$0xff]
    %v194 = vld [vmem:[#allocation2 + $0x370] sm:$0xff]
    %v195 = vld [vmem:[#allocation2 + $0x378] sm:$0xff]
    %v196 = vld [vmem:[#allocation2 + $0x380] sm:$0xff]
    %v197 = vld [vmem:[#allocation2 + $0x388] sm:$0xff]
    %v198 = vld [vmem:[#allocation2 + $0x390] sm:$0xff]
    %v199 = vld [vmem:[#allocation2 + $0x398] sm:$0xff]
    %v200 = vld [vmem:[#allocation2 + $0x3a0] sm:$0xff]
    %v201 = vld [vmem:[#allocation2 + $0x3a8] sm:$0xff]
    %v202 = vld [vmem:[#allocation2 + $0x3b0] sm:$0xff]
    %v203 = vld [vmem:[#allocation2 + $0x3b8] sm:$0xff]
    %v204 = vld [vmem:[#allocation2 + $0x3c0] sm:$0xff]
    %v205 = vld [vmem:[#allocation2 + $0x3c8] sm:$0xff]
    %v206 = vld [vmem:[#allocation2 + $0x3d0] sm:$0xff]
    %v207 = vld [vmem:[#allocation2 + $0x3d8] sm:$0xff]
    %v208 = vld [vmem:[#allocation2 + $0x3e0] sm:$0xff]
    %v209 = vld [vmem:[#allocation2 + $0x3e8] sm:$0xff]
    %v210 = vld [vmem:[#allocation2 + $0x3f0] sm:$0xff]
    %v211 = vld [vmem:[#allocation2 + $0x3f8] sm:$0xff]
    %v212 = vld [vmem:[#allocation2 + $0x400] sm:$0xff]
    %v213 = vld [vmem:[#allocation2 + $0x408] sm:$0xff]
    %v214 = vld [vmem:[#allocation2 + $0x410] sm:$0xff]
    %v215 = vld [vmem:[#allocation2 + $0x418] sm:$0xff]
    %v216 = vld [vmem:[#allocation2 + $0x420] sm:$0xff]
    %v217 = vld [vmem:[#allocation2 + $0x428] sm:$0xff]
    %v218 = vld [vmem:[#allocation2 + $0x430] sm:$0xff]
    %v219 = vld [vmem:[#allocation2 + $0x438] sm:$0xff]
    %v220 = vld [vmem:[#allocation2 + $0x440] sm:$0xff]
    %v221 = vld [vmem:[#allocation2 + $0x448] sm:$0xff]
    %v222 = vld [vmem:[#allocation2 + $0x450] sm:$0xff]
    %v223 = vld [vmem:[#allocation2 + $0x458] sm:$0xff]
    %v224 = vld [vmem:[#allocation2 + $0x460] sm:$0xff]
    %v225 = vld [vmem:[#allocation2 + $0x468] sm:$0xff]
    %v226 = vld [vmem:[#allocation2 + $0x470] sm:$0xff]
    %v227 = vld [vmem:[#allocation2 + $0x478] sm:$0xff]
    %v228 = vld [vmem:[#allocation2 + $0x480] sm:$0xff]
    %v229 = vld [vmem:[#allocation2 + $0x488] sm:$0xff]
    %v230 = vld [vmem:[#allocation2 + $0x490] sm:$0xff]
    %v231 = vld [vmem:[#allocation2 + $0x498] sm:$0xff]
    %v232 = vld [vmem:[#allocation2 + $0x4a0] sm:$0xff]
    %v233 = vld [vmem:[#allocation2 + $0x4a8] sm:$0xff]
    %v234 = vld [vmem:[#allocation2 + $0x4b0] sm:$0xff]
    %v235 = vld [vmem:[#allocation2 + $0x4b8] sm:$0xff]
    %v236 = vld [vmem:[#allocation2 + $0x4c0] sm:$0xff]
    %v237 = vld [vmem:[#allocation2 + $0x4c8] sm:$0xff]
    %v238 = vld [vmem:[#allocation2 + $0x4d0] sm:$0xff]
    %v239 = vld [vmem:[#allocation2 + $0x4d8] sm:$0xff]
    %v240 = vld [vmem:[#allocation2 + $0x4e0] sm:$0xff]
    %v241 = vld [vmem:[#allocation2 + $0x4e8] sm:$0xff]
    %v242 = vld [vmem:[#allocation2 + $0x4f0] sm:$0xff]
    %v243 = vld [vmem:[#allocation2 + $0x4f8] sm:$0xff]
    %v244 = vld [vmem:[#allocation2 + $0x500] sm:$0xff]
    %v245 = vld [vmem:[#allocation2 + $0x508] sm:$0xff]
    %v246 = vld [vmem:[#allocation2 + $0x510] sm:$0xff]
    %v247 = vld [vmem:[#allocation2 + $0x518] sm:$0xff]
    %v248 = vld [vmem:[#allocation2 + $0x520] sm:$0xff]
    %v249 = vld [vmem:[#allocation2 + $0x528] sm:$0xff]
    %v250 = vld [vmem:[#allocation2 + $0x530] sm:$0xff]
    %v251 = vld [vmem:[#allocation2 + $0x538] sm:$0xff]
    %v252 = vld [vmem:[#allocation2 + $0x540] sm:$0xff]
    %v253 = vld [vmem:[#allocation2 + $0x548] sm:$0xff]
    %v254 = vld [vmem:[#allocation2 + $0x550] sm:$0xff]
    %v255 = vld [vmem:[#allocation2 + $0x558] sm:$0xff]
    %v256 = vld [vmem:[#allocation2 + $0x560] sm:$0xff]
    %v257 = vld [vmem:[#allocation2 + $0x568] sm:$0xff]
    %v258 = vld [vmem:[#allocation2 + $0x570] sm:$0xff]
    %v259 = vld [vmem:[#allocation2 + $0x578] sm:$0xff]
    %v260 = vld [vmem:[#allocation2 + $0x580] sm:$0xff]
    %v261 = vld [vmem:[#allocation2 + $0x588] sm:$0xff]
    %v262 = vld [vmem:[#allocation2 + $0x590] sm:$0xff]
    %v263 = vld [vmem:[#allocation2 + $0x598] sm:$0xff]
    %v264 = vld [vmem:[#allocation2 + $0x5a0] sm:$0xff]
    %v265 = vld [vmem:[#allocation2 + $0x5a8] sm:$0xff]
    %v266 = vld [vmem:[#allocation2 + $0x5b0] sm:$0xff]
    %v267 = vld [vmem:[#allocation2 + $0x5b8] sm:$0xff]
    %v268 = vld [vmem:[#allocation2 + $0x5c0] sm:$0xff]
    %v269 = vld [vmem:[#allocation2 + $0x5c8] sm:$0xff]
    %v270 = vld [vmem:[#allocation2 + $0x5d0] sm:$0xff]
    %v271 = vld [vmem:[#allocation2 + $0x5d8] sm:$0xff]
    %v272 = vld [vmem:[#allocation2 + $0x5e0] sm:$0xff]
    %v273 = vld [vmem:[#allocation2 + $0x5e8] sm:$0xff]
    %v274 = vld [vmem:[#allocation2 + $0x5f0] sm:$0xff]
    %v275 = vld [vmem:[#allocation2 + $0x5f8] sm:$0xff]
    %v276 = vld [vmem:[#allocation2 + $0x600] sm:$0xff]
    %v277 = vld [vmem:[#allocation2 + $0x608] sm:$0xff]
    %v278 = vld [vmem:[#allocation2 + $0x610] sm:$0xff]
    %v279 = vld [vmem:[#allocation2 + $0x618] sm:$0xff]
    %v280 = vld [vmem:[#allocation2 + $0x620] sm:$0xff]
    %v281 = vld [vmem:[#allocation2 + $0x628] sm:$0xff]
    %v282 = vld [vmem:[#allocation2 + $0x630] sm:$0xff]
    %v283 = vld [vmem:[#allocation2 + $0x638] sm:$0xff]
    %v284 = vld [vmem:[#allocation2 + $0x640] sm:$0xff]
    %v285 = vld [vmem:[#allocation2 + $0x648] sm:$0xff]
    %v286 = vld [vmem:[#allocation2 + $0x650] sm:$0xff]
    %v287 = vld [vmem:[#allocation2 + $0x658] sm:$0xff]
    %v288 = vld [vmem:[#allocation2 + $0x660] sm:$0xff]
    %v289 = vld [vmem:[#allocation2 + $0x668] sm:$0xff]
    %v290 = vld [vmem:[#allocation2 + $0x670] sm:$0xff]
    %v291 = vld [vmem:[#allocation2 + $0x678] sm:$0xff]
    %v292 = vld [vmem:[#allocation2 + $0x680] sm:$0xff]
    %v293 = vld [vmem:[#allocation2 + $0x688] sm:$0xff]
    %v294 = vld [vmem:[#allocation2 + $0x690] sm:$0xff]
    %v295 = vld [vmem:[#allocation2 + $0x698] sm:$0xff]
    %v296 = vld [vmem:[#allocation2 + $0x6a0] sm:$0xff]
    %v297 = vld [vmem:[#allocation2 + $0x6a8] sm:$0xff]
    %v298 = vld [vmem:[#allocation2 + $0x6b0] sm:$0xff]
    %v299 = vld [vmem:[#allocation2 + $0x6b8] sm:$0xff]
    %v300 = vld [vmem:[#allocation2 + $0x6c0] sm:$0xff]
    %v301 = vld [vmem:[#allocation2 + $0x6c8] sm:$0xff]
    %v302 = vld [vmem:[#allocation2 + $0x6d0] sm:$0xff]
    %v303 = vld [vmem:[#allocation2 + $0x6d8] sm:$0xff]
    %v304 = vld [vmem:[#allocation2 + $0x6e0] sm:$0xff]
    %v305 = vld [vmem:[#allocation2 + $0x6e8] sm:$0xff]
    %v306 = vld [vmem:[#allocation2 + $0x6f0] sm:$0xff]
    %v307 = vld [vmem:[#allocation2 + $0x6f8] sm:$0xff]
    %v308 = vld [vmem:[#allocation2 + $0x700] sm:$0xff]
    %v309 = vld [vmem:[#allocation2 + $0x708] sm:$0xff]
    %v310 = vld [vmem:[#allocation2 + $0x710] sm:$0xff]
    %v311 = vld [vmem:[#allocation2 + $0x718] sm:$0xff]
    %v312 = vld [vmem:[#allocation2 + $0x720] sm:$0xff]
    %v313 = vld [vmem:[#allocation2 + $0x728] sm:$0xff]
    %v314 = vld [vmem:[#allocation2 + $0x730] sm:$0xff]
    %v315 = vld [vmem:[#allocation2 + $0x738] sm:$0xff]
    %v316 = vld [vmem:[#allocation2 + $0x740] sm:$0xff]
    %v317 = vld [vmem:[#allocation2 + $0x748] sm:$0xff]
    %v318 = vld [vmem:[#allocation2 + $0x750] sm:$0xff]
    %v319 = vld [vmem:[#allocation2 + $0x758] sm:$0xff]
    %v320 = vld [vmem:[#allocation2 + $0x760] sm:$0xff]
    %v321 = vld [vmem:[#allocation2 + $0x768] sm:$0xff]
    %v322 = vld [vmem:[#allocation2 + $0x770] sm:$0xff]
    %v323 = vld [vmem:[#allocation2 + $0x778] sm:$0xff]
    %v324 = vld [vmem:[#allocation2 + $0x780] sm:$0xff]
    %v325 = vld [vmem:[#allocation2 + $0x788] sm:$0xff]
    %v326 = vld [vmem:[#allocation2 + $0x790] sm:$0xff]
    %v327 = vld [vmem:[#allocation2 + $0x798] sm:$0xff]
    %v328 = vld [vmem:[#allocation2 + $0x7a0] sm:$0xff]
    %v329 = vld [vmem:[#allocation2 + $0x7a8] sm:$0xff]
    %v330 = vld [vmem:[#allocation2 + $0x7b0] sm:$0xff]
    %v331 = vld [vmem:[#allocation2 + $0x7b8] sm:$0xff]
    %v332 = vld [vmem:[#allocation2 + $0x7c0] sm:$0xff]
    %v333 = vld [vmem:[#allocation2 + $0x7c8] sm:$0xff]
    %v334 = vld [vmem:[#allocation2 + $0x7d0] sm:$0xff]
    %v335 = vld [vmem:[#allocation2 + $0x7d8] sm:$0xff]
    %v336 = vld [vmem:[#allocation2 + $0x7e0] sm:$0xff]
    %v337 = vld [vmem:[#allocation2 + $0x7e8] sm:$0xff]
    %v338 = vld [vmem:[#allocation2 + $0x7f0] sm:$0xff]
    %v339 = vld [vmem:[#allocation2 + $0x7f8] sm:$0xff]
    %v340 = vld [vmem:[#allocation2 + $0x800] sm:$0xff]
    %v341 = vld [vmem:[#allocation2 + $0x808] sm:$0xff]
    %v342 = vld [vmem:[#allocation2 + $0x810] sm:$0xff]
    %v343 = vld [vmem:[#allocation2 + $0x818] sm:$0xff]
    %v344 = vld [vmem:[#allocation2 + $0x820] sm:$0xff]
    %v345 = vld [vmem:[#allocation2 + $0x828] sm:$0xff]
    %v346 = vld [vmem:[#allocation2 + $0x830] sm:$0xff]
    %v347 = vld [vmem:[#allocation2 + $0x838] sm:$0xff]
    %v348 = vld [vmem:[#allocation2 + $0x840] sm:$0xff]
    %v349 = vld [vmem:[#allocation2 + $0x848] sm:$0xff]
    %v350 = vld [vmem:[#allocation2 + $0x850] sm:$0xff]
    %v351 = vld [vmem:[#allocation2 + $0x858] sm:$0xff]
    %v352 = vld [vmem:[#allocation2 + $0x860] sm:$0xff]
    %v353 = vld [vmem:[#allocation2 + $0x868] sm:$0xff]
    %v354 = vld [vmem:[#allocation2 + $0x870] sm:$0xff]
    %v355 = vld [vmem:[#allocation2 + $0x878] sm:$0xff]
    %v356 = vld [vmem:[#allocation2 + $0x880] sm:$0xff]
    %v357 = vld [vmem:[#allocation2 + $0x888] sm:$0xff]
    %v358 = vld [vmem:[#allocation2 + $0x890] sm:$0xff]
    %v359 = vld [vmem:[#allocation2 + $0x898] sm:$0xff]
    %v360 = vld [vmem:[#allocation2 + $0x8a0] sm:$0xff]
    %v361 = vld [vmem:[#allocation2 + $0x8a8] sm:$0xff]
    %v362 = vld [vmem:[#allocation2 + $0x8b0] sm:$0xff]
    %v363 = vld [vmem:[#allocation2 + $0x8b8] sm:$0xff]
    %v364 = vld [vmem:[#allocation2 + $0x8c0] sm:$0xff]
    %v365 = vld [vmem:[#allocation2 + $0x8c8] sm:$0xff]
    %v366 = vld [vmem:[#allocation2 + $0x8d0] sm:$0xff]
    %v367 = vld [vmem:[#allocation2 + $0x8d8] sm:$0xff]
    %v368 = vld [vmem:[#allocation2 + $0x8e0] sm:$0xff]
    %v369 = vld [vmem:[#allocation2 + $0x8e8] sm:$0xff]
    %v370 = vld [vmem:[#allocation2 + $0x8f0] sm:$0xff]
    %v371 = vld [vmem:[#allocation2 + $0x8f8] sm:$0xff]
    %v372 = vld [vmem:[#allocation2 + $0x900] sm:$0xff]
    %v373 = vld [vmem:[#allocation2 + $0x908] sm:$0xff]
    %v374 = vld [vmem:[#allocation2 + $0x910] sm:$0xff]
    %v375 = vld [vmem:[#allocation2 + $0x918] sm:$0xff]
    %v376 = vld [vmem:[#allocation2 + $0x920] sm:$0xff]
    %v377 = vld [vmem:[#allocation2 + $0x928] sm:$0xff]
    %v378 = vld [vmem:[#allocation2 + $0x930] sm:$0xff]
    %v379 = vld [vmem:[#allocation2 + $0x938] sm:$0xff]
    %v380 = vld [vmem:[#allocation2 + $0x940] sm:$0xff]
    %v381 = vld [vmem:[#allocation2 + $0x948] sm:$0xff]
    %v382 = vld [vmem:[#allocation2 + $0x950] sm:$0xff]
    %v383 = vld [vmem:[#allocation2 + $0x958] sm:$0xff]
    %v384 = vld [vmem:[#allocation2 + $0x960] sm:$0xff]
    %v385 = vld [vmem:[#allocation2 + $0x968] sm:$0xff]
    %v386 = vld [vmem:[#allocation2 + $0x970] sm:$0xff]
    %v387 = vld [vmem:[#allocation2 + $0x978] sm:$0xff]
    %v388 = vld [vmem:[#allocation2 + $0x980] sm:$0xff]
    %v389 = vld [vmem:[#allocation2 + $0x988] sm:$0xff]
    %v390 = vld [vmem:[#allocation2 + $0x990] sm:$0xff]
    %v391 = vld [vmem:[#allocation2 + $0x998] sm:$0xff]
    %v392 = vld [vmem:[#allocation2 + $0x9a0] sm:$0xff]
    %v393 = vld [vmem:[#allocation2 + $0x9a8] sm:$0xff]
    %v394 = vld [vmem:[#allocation2 + $0x9b0] sm:$0xff]
    %v395 = vld [vmem:[#allocation2 + $0x9b8] sm:$0xff]
    %v396 = vld [vmem:[#allocation2 + $0x9c0] sm:$0xff]
    %v397 = vld [vmem:[#allocation2 + $0x9c8] sm:$0xff]
    %v398 = vld [vmem:[#allocation2 + $0x9d0] sm:$0xff]
    %v399 = vld [vmem:[#allocation2 + $0x9d8] sm:$0xff]
    %v400 = vld [vmem:[#allocation2 + $0x9e0] sm:$0xff]
    %v401 = vld [vmem:[#allocation2 + $0x9e8] sm:$0xff]
    %v402 = vld [vmem:[#allocation2 + $0x9f0] sm:$0xff]
    %v403 = vld [vmem:[#allocation2 + $0x9f8] sm:$0xff]
    %v404 = vld [vmem:[#allocation2 + $0xa00] sm:$0xff]
    %v405 = vld [vmem:[#allocation2 + $0xa08] sm:$0xff]
    %v406 = vld [vmem:[#allocation2 + $0xa10] sm:$0xff]
    %v407 = vld [vmem:[#allocation2 + $0xa18] sm:$0xff]
    %v408 = vld [vmem:[#allocation2 + $0xa20] sm:$0xff]
    %v409 = vld [vmem:[#allocation2 + $0xa28] sm:$0xff]
    %v410 = vld [vmem:[#allocation2 + $0xa30] sm:$0xff]
    %v411 = vld [vmem:[#allocation2 + $0xa38] sm:$0xff]
    %v412 = vld [vmem:[#allocation2 + $0xa40] sm:$0xff]
    %v413 = vld [vmem:[#allocation2 + $0xa48] sm:$0xff]
    %v414 = vld [vmem:[#allocation2 + $0xa50] sm:$0xff]
    %v415 = vld [vmem:[#allocation2 + $0xa58] sm:$0xff]
    %v416 = vld [vmem:[#allocation2 + $0xa60] sm:$0xff]
    %v417 = vld [vmem:[#allocation2 + $0xa68] sm:$0xff]
    %v418 = vld [vmem:[#allocation2 + $0xa70] sm:$0xff]
    %v419 = vld [vmem:[#allocation2 + $0xa78] sm:$0xff]
    %v420 = vld [vmem:[#allocation2 + $0xa80] sm:$0xff]
    %v421 = vld [vmem:[#allocation2 + $0xa88] sm:$0xff]
    %v422 = vld [vmem:[#allocation2 + $0xa90] sm:$0xff]
    %v423 = vld [vmem:[#allocation2 + $0xa98] sm:$0xff]
    %v424 = vld [vmem:[#allocation2 + $0xaa0] sm:$0xff]
    %v425 = vld [vmem:[#allocation2 + $0xaa8] sm:$0xff]
    %v426 = vld [vmem:[#allocation2 + $0xab0] sm:$0xff]
    %v427 = vld [vmem:[#allocation2 + $0xab8] sm:$0xff]
    %v428 = vld [vmem:[#allocation2 + $0xac0] sm:$0xff]
    %v429 = vld [vmem:[#allocation2 + $0xac8] sm:$0xff]
    %v430 = vld [vmem:[#allocation2 + $0xad0] sm:$0xff]
    %v431 = vld [vmem:[#allocation2 + $0xad8] sm:$0xff]
    %v432 = vld [vmem:[#allocation2 + $0xae0] sm:$0xff]
    %v433 = vld [vmem:[#allocation2 + $0xae8] sm:$0xff]
    %v434 = vld [vmem:[#allocation2 + $0xaf0] sm:$0xff]
    %v435 = vld [vmem:[#allocation2 + $0xaf8] sm:$0xff]
    %v436 = vld [vmem:[#allocation2 + $0xb00] sm:$0xff]
    %v437 = vld [vmem:[#allocation2 + $0xb08] sm:$0xff]
    %v438 = vld [vmem:[#allocation2 + $0xb10] sm:$0xff]
    %v439 = vld [vmem:[#allocation2 + $0xb18] sm:$0xff]
    %v440 = vld [vmem:[#allocation2 + $0xb20] sm:$0xff]
    %v441 = vld [vmem:[#allocation2 + $0xb28] sm:$0xff]
    %v442 = vld [vmem:[#allocation2 + $0xb30] sm:$0xff]
    %v443 = vld [vmem:[#allocation2 + $0xb38] sm:$0xff]
    %v444 = vld [vmem:[#allocation2 + $0xb40] sm:$0xff]
    %v445 = vld [vmem:[#allocation2 + $0xb48] sm:$0xff]
    %v446 = vld [vmem:[#allocation2 + $0xb50] sm:$0xff]
    %v447 = vld [vmem:[#allocation2 + $0xb58] sm:$0xff]
    %v448 = vld [vmem:[#allocation2 + $0xb60] sm:$0xff]
    %v449 = vld [vmem:[#allocation2 + $0xb68] sm:$0xff]
    %v450 = vld [vmem:[#allocation2 + $0xb70] sm:$0xff]
    %v451 = vld [vmem:[#allocation2 + $0xb78] sm:$0xff]
    %v452 = vld [vmem:[#allocation2 + $0xb80] sm:$0xff]
    %v453 = vld [vmem:[#allocation2 + $0xb88] sm:$0xff]
    %v454 = vld [vmem:[#allocation2 + $0xb90] sm:$0xff]
    %v455 = vld [vmem:[#allocation2 + $0xb98] sm:$0xff]
    %v456 = vld [vmem:[#allocation2 + $0xba0] sm:$0xff]
    %v457 = vld [vmem:[#allocation2 + $0xba8] sm:$0xff]
    %v458 = vld [vmem:[#allocation2 + $0xbb0] sm:$0xff]
    %v459 = vld [vmem:[#allocation2 + $0xbb8] sm:$0xff]
    %v460 = vld [vmem:[#allocation2 + $0xbc0] sm:$0xff]
    %v461 = vld [vmem:[#allocation2 + $0xbc8] sm:$0xff]
    %v462 = vld [vmem:[#allocation2 + $0xbd0] sm:$0xff]
    %v463 = vld [vmem:[#allocation2 + $0xbd8] sm:$0xff]
    %v464 = vld [vmem:[#allocation2 + $0xbe0] sm:$0xff]
    %v465 = vld [vmem:[#allocation2 + $0xbe8] sm:$0xff]
    %v466 = vld [vmem:[#allocation2 + $0xbf0] sm:$0xff]
    %v467 = vld [vmem:[#allocation2 + $0xbf8] sm:$0xff]
    %v468 = vld [vmem:[#allocation2 + $0xc00] sm:$0xff]
    %v469 = vld [vmem:[#allocation2 + $0xc08] sm:$0xff]
    %v470 = vld [vmem:[#allocation2 + $0xc10] sm:$0xff]
    %v471 = vld [vmem:[#allocation2 + $0xc18] sm:$0xff]
    %v472 = vld [vmem:[#allocation2 + $0xc20] sm:$0xff]
    %v473 = vld [vmem:[#allocation2 + $0xc28] sm:$0xff]
    %v474 = vld [vmem:[#allocation2 + $0xc30] sm:$0xff]
    %v475 = vld [vmem:[#allocation2 + $0xc38] sm:$0xff]
    %v476 = vld [vmem:[#allocation2 + $0xc40] sm:$0xff]
    %v477 = vld [vmem:[#allocation2 + $0xc48] sm:$0xff]
    %v478 = vld [vmem:[#allocation2 + $0xc50] sm:$0xff]
    %v479 = vld [vmem:[#allocation2 + $0xc58] sm:$0xff]
    %v480 = vld [vmem:[#allocation2 + $0xc60] sm:$0xff]
    %v481 = vld [vmem:[#allocation2 + $0xc68] sm:$0xff]
    %v482 = vld [vmem:[#allocation2 + $0xc70] sm:$0xff]
    %v483 = vld [vmem:[#allocation2 + $0xc78] sm:$0xff]
    %v484 = vld [vmem:[#allocation2 + $0xc80] sm:$0xff]
    %v485 = vld [vmem:[#allocation2 + $0xc88] sm:$0xff]
    %v486 = vld [vmem:[#allocation2 + $0xc90] sm:$0xff]
    %v487 = vld [vmem:[#allocation2 + $0xc98] sm:$0xff]
    %v488 = vld [vmem:[#allocation2 + $0xca0] sm:$0xff]
    %v489 = vld [vmem:[#allocation2 + $0xca8] sm:$0xff]
    %v490 = vld [vmem:[#allocation2 + $0xcb0] sm:$0xff]
    %v491 = vld [vmem:[#allocation2 + $0xcb8] sm:$0xff]
    %v492 = vld [vmem:[#allocation2 + $0xcc0] sm:$0xff]
    %v493 = vld [vmem:[#allocation2 + $0xcc8] sm:$0xff]
    %v494 = vld [vmem:[#allocation2 + $0xcd0] sm:$0xff]
    %v495 = vld [vmem:[#allocation2 + $0xcd8] sm:$0xff]
    %v496 = vld [vmem:[#allocation2 + $0xce0] sm:$0xff]
    %v497 = vld [vmem:[#allocation2 + $0xce8] sm:$0xff]
    %v498 = vld [vmem:[#allocation2 + $0xcf0] sm:$0xff]
    %v499 = vld [vmem:[#allocation2 + $0xcf8] sm:$0xff]
    %v500 = vld [vmem:[#allocation2 + $0xd00] sm:$0xff]
    %v501 = vld [vmem:[#allocation2 + $0xd08] sm:$0xff]
    %v502 = vld [vmem:[#allocation2 + $0xd10] sm:$0xff]
    %v503 = vld [vmem:[#allocation2 + $0xd18] sm:$0xff]
    %v504 = vld [vmem:[#allocation2 + $0xd20] sm:$0xff]
    %v505 = vld [vmem:[#allocation2 + $0xd28] sm:$0xff]
    %v506 = vld [vmem:[#allocation2 + $0xd30] sm:$0xff]
    %v507 = vld [vmem:[#allocation2 + $0xd38] sm:$0xff]
    %v508 = vld [vmem:[#allocation2 + $0xd40] sm:$0xff]
    %v509 = vld [vmem:[#allocation2 + $0xd48] sm:$0xff]
    %v510 = vld [vmem:[#allocation2 + $0xd50] sm:$0xff]
    %v511 = vld [vmem:[#allocation2 + $0xd58] sm:$0xff]
    %v512 = vld [vmem:[#allocation2 + $0xd60] sm:$0xff]
    %v513 = vld [vmem:[#allocation2 + $0xd68] sm:$0xff]
    %v514 = vld [vmem:[#allocation2 + $0xd70] sm:$0xff]
    %v515 = vld [vmem:[#allocation2 + $0xd78] sm:$0xff]
    %v516 = vld [vmem:[#allocation2 + $0xd80] sm:$0xff]
    %v517 = vld [vmem:[#allocation2 + $0xd88] sm:$0xff]
    %v518 = vld [vmem:[#allocation2 + $0xd90] sm:$0xff]
    %v519 = vld [vmem:[#allocation2 + $0xd98] sm:$0xff]
    %v520 = vld [vmem:[#allocation2 + $0xda0] sm:$0xff]
    %v521 = vld [vmem:[#allocation2 + $0xda8] sm:$0xff]
    %v522 = vld [vmem:[#allocation2 + $0xdb0] sm:$0xff]
    %v523 = vld [vmem:[#allocation2 + $0xdb8] sm:$0xff]
    %v524 = vld [vmem:[#allocation2 + $0xdc0] sm:$0xff]
    %v525 = vld [vmem:[#allocation2 + $0xdc8] sm:$0xff]
    %v526 = vld [vmem:[#allocation2 + $0xdd0] sm:$0xff]
    %v527 = vld [vmem:[#allocation2 + $0xdd8] sm:$0xff]
    %v528 = vld [vmem:[#allocation2 + $0xde0] sm:$0xff]
    %v529 = vld [vmem:[#allocation2 + $0xde8] sm:$0xff]
    %v530 = vld [vmem:[#allocation2 + $0xdf0] sm:$0xff]
    %v531 = vld [vmem:[#allocation2 + $0xdf8] sm:$0xff]
    %v532 = vld [vmem:[#allocation2 + $0xe00] sm:$0xff]
    %v533 = vld [vmem:[#allocation2 + $0xe08] sm:$0xff]
    %v534 = vld [vmem:[#allocation2 + $0xe10] sm:$0xff]
    %v535 = vld [vmem:[#allocation2 + $0xe18] sm:$0xff]
    %v536 = vld [vmem:[#allocation2 + $0xe20] sm:$0xff]
    %v537 = vld [vmem:[#allocation2 + $0xe28] sm:$0xff]
    %v538 = vld [vmem:[#allocation2 + $0xe30] sm:$0xff]
    %v539 = vld [vmem:[#allocation2 + $0xe38] sm:$0xff]
    %v540 = vld [vmem:[#allocation2 + $0xe40] sm:$0xff]
    %v541 = vld [vmem:[#allocation2 + $0xe48] sm:$0xff]
    %v542 = vld [vmem:[#allocation2 + $0xe50] sm:$0xff]
    %v543 = vld [vmem:[#allocation2 + $0xe58] sm:$0xff]
    %v544 = vld [vmem:[#allocation2 + $0xe60] sm:$0xff]
    %v545 = vld [vmem:[#allocation2 + $0xe68] sm:$0xff]
    %v546 = vld [vmem:[#allocation2 + $0xe70] sm:$0xff]
    %v547 = vld [vmem:[#allocation2 + $0xe78] sm:$0xff]
    %v548 = vld [vmem:[#allocation2 + $0xe80] sm:$0xff]
    %v549 = vld [vmem:[#allocation2 + $0xe88] sm:$0xff]
    %v550 = vld [vmem:[#allocation2 + $0xe90] sm:$0xff]
    %v551 = vld [vmem:[#allocation2 + $0xe98] sm:$0xff]
    %v552 = vld [vmem:[#allocation2 + $0xea0] sm:$0xff]
    %v553 = vld [vmem:[#allocation2 + $0xea8] sm:$0xff]
    %v554 = vld [vmem:[#allocation2 + $0xeb0] sm:$0xff]
    %v555 = vld [vmem:[#allocation2 + $0xeb8] sm:$0xff]
    %v556 = vld [vmem:[#allocation2 + $0xec0] sm:$0xff]
    %v557 = vld [vmem:[#allocation2 + $0xec8] sm:$0xff]
    %v558 = vld [vmem:[#allocation2 + $0xed0] sm:$0xff]
    %v559 = vld [vmem:[#allocation2 + $0xed8] sm:$0xff]
    %v560 = vld [vmem:[#allocation2 + $0xee0] sm:$0xff]
    %v561 = vld [vmem:[#allocation2 + $0xee8] sm:$0xff]
    %v562 = vld [vmem:[#allocation2 + $0xef0] sm:$0xff]
    %v563 = vld [vmem:[#allocation2 + $0xef8] sm:$0xff]
    %v564 = vld [vmem:[#allocation2 + $0xf00] sm:$0xff]
    %v565 = vld [vmem:[#allocation2 + $0xf08] sm:$0xff]
    %v566 = vld [vmem:[#allocation2 + $0xf10] sm:$0xff]
    %v567 = vld [vmem:[#allocation2 + $0xf18] sm:$0xff]
    %v568 = vld [vmem:[#allocation2 + $0xf20] sm:$0xff]
    %v569 = vld [vmem:[#allocation2 + $0xf28] sm:$0xff]
    %v570 = vld [vmem:[#allocation2 + $0xf30] sm:$0xff]
    %v571 = vld [vmem:[#allocation2 + $0xf38] sm:$0xff]
    %v572 = vld [vmem:[#allocation2 + $0xf40] sm:$0xff]
    %v573 = vld [vmem:[#allocation2 + $0xf48] sm:$0xff]
    %v574 = vld [vmem:[#allocation2 + $0xf50] sm:$0xff]
    %v575 = vld [vmem:[#allocation2 + $0xf58] sm:$0xff]
    %v576 = vld [vmem:[#allocation2 + $0xf60] sm:$0xff]
    %v577 = vld [vmem:[#allocation2 + $0xf68] sm:$0xff]
    %v578 = vld [vmem:[#allocation2 + $0xf70] sm:$0xff]
    %v579 = vld [vmem:[#allocation2 + $0xf78] sm:$0xff]
    %v580 = vld [vmem:[#allocation2 + $0xf80] sm:$0xff]
    %v581 = vld [vmem:[#allocation2 + $0xf88] sm:$0xff]
    %v582 = vld [vmem:[#allocation2 + $0xf90] sm:$0xff]
    %v583 = vld [vmem:[#allocation2 + $0xf98] sm:$0xff]
    %v584 = vld [vmem:[#allocation2 + $0xfa0] sm:$0xff]
    %v585 = vld [vmem:[#allocation2 + $0xfa8] sm:$0xff]
    %v586 = vld [vmem:[#allocation2 + $0xfb0] sm:$0xff]
    %v587 = vld [vmem:[#allocation2 + $0xfb8] sm:$0xff]
    %v588 = vld [vmem:[#allocation2 + $0xfc0] sm:$0xff]
    %v589 = vld [vmem:[#allocation2 + $0xfc8] sm:$0xff]
    %v590 = vld [vmem:[#allocation2 + $0xfd0] sm:$0xff]
    %v591 = vld [vmem:[#allocation2 + $0xfd8] sm:$0xff]
    %v592 = vld [vmem:[#allocation2 + $0xfe0] sm:$0xff]
    %v593 = vld [vmem:[#allocation2 + $0xfe8] sm:$0xff]
    %v594 = vld [vmem:[#allocation2 + $0xff0] sm:$0xff]
    %v595 = vld [vmem:[#allocation2 + $0xff8] sm:$0xff]
    %v596 = vld [vmem:[#allocation2 + $0x1000] sm:$0xff]
    %v597 = vld [vmem:[#allocation2 + $0x1008] sm:$0xff]
    %v598 = vld [vmem:[#allocation2 + $0x1010] sm:$0xff]
    %v599 = vld [vmem:[#allocation2 + $0x1018] sm:$0xff]
    %v600 = vld [vmem:[#allocation2 + $0x1020] sm:$0xff]
    %v601 = vld [vmem:[#allocation2 + $0x1028] sm:$0xff]
    %v602 = vld [vmem:[#allocation2 + $0x1030] sm:$0xff]
    %v603 = vld [vmem:[#allocation2 + $0x1038] sm:$0xff]
    %v604 = vld [vmem:[#allocation2 + $0x1040] sm:$0xff]
    %v605 = vld [vmem:[#allocation2 + $0x1048] sm:$0xff]
    %v606 = vld [vmem:[#allocation2 + $0x1050] sm:$0xff]
    %v607 = vld [vmem:[#allocation2 + $0x1058] sm:$0xff]
    %v608 = vld [vmem:[#allocation2 + $0x1060] sm:$0xff]
    %v609 = vld [vmem:[#allocation2 + $0x1068] sm:$0xff]
    %v610 = vld [vmem:[#allocation2 + $0x1070] sm:$0xff]
    %v611 = vld [vmem:[#allocation2 + $0x1078] sm:$0xff]
    %v612 = vld [vmem:[#allocation2 + $0x1080] sm:$0xff]
    %v613 = vld [vmem:[#allocation2 + $0x1088] sm:$0xff]
    %v614 = vld [vmem:[#allocation2 + $0x1090] sm:$0xff]
    %v615 = vld [vmem:[#allocation2 + $0x1098] sm:$0xff]
    %v616 = vld [vmem:[#allocation2 + $0x10a0] sm:$0xff]
    %v617 = vld [vmem:[#allocation2 + $0x10a8] sm:$0xff]
    %v618 = vld [vmem:[#allocation2 + $0x10b0] sm:$0xff]
    %v619 = vld [vmem:[#allocation2 + $0x10b8] sm:$0xff]
    %v620 = vld [vmem:[#allocation2 + $0x10c0] sm:$0xff]
    %v621 = vld [vmem:[#allocation2 + $0x10c8] sm:$0xff]
    %v622 = vld [vmem:[#allocation2 + $0x10d0] sm:$0xff]
    %v623 = vld [vmem:[#allocation2 + $0x10d8] sm:$0xff]
    %v624 = vld [vmem:[#allocation2 + $0x10e0] sm:$0xff]
    %v625 = vld [vmem:[#allocation2 + $0x10e8] sm:$0xff]
    %v626 = vld [vmem:[#allocation2 + $0x10f0] sm:$0xff]
    %v627 = vld [vmem:[#allocation2 + $0x10f8] sm:$0xff]
    %v628 = vld [vmem:[#allocation2 + $0x1100] sm:$0xff]
    %v629 = vld [vmem:[#allocation2 + $0x1108] sm:$0xff]
    %v630 = vld [vmem:[#allocation2 + $0x1110] sm:$0xff]
    %v631 = vld [vmem:[#allocation2 + $0x1118] sm:$0xff]
    %v632 = vld [vmem:[#allocation2 + $0x1120] sm:$0xff]
    %v633 = vld [vmem:[#allocation2 + $0x1128] sm:$0xff]
    %v634 = vld [vmem:[#allocation2 + $0x1130] sm:$0xff]
    %v635 = vld [vmem:[#allocation2 + $0x1138] sm:$0xff]
    %v636 = vld [vmem:[#allocation2 + $0x1140] sm:$0xff]
    %v637 = vld [vmem:[#allocation2 + $0x1148] sm:$0xff]
    %v638 = vld [vmem:[#allocation2 + $0x1150] sm:$0xff]
    %v639 = vld [vmem:[#allocation2 + $0x1158] sm:$0xff]
    %v640 = vld [vmem:[#allocation2 + $0x1160] sm:$0xff]
    %v641 = vld [vmem:[#allocation2 + $0x1168] sm:$0xff]
    %v642 = vld [vmem:[#allocation2 + $0x1170] sm:$0xff]
    %v643 = vld [vmem:[#allocation2 + $0x1178] sm:$0xff]
    %v644 = vld [vmem:[#allocation2 + $0x1180] sm:$0xff]
    %v645 = vld [vmem:[#allocation2 + $0x1188] sm:$0xff]
    %v646 = vld [vmem:[#allocation2 + $0x1190] sm:$0xff]
    %v647 = vld [vmem:[#allocation2 + $0x1198] sm:$0xff]
    %v648 = vld [vmem:[#allocation2 + $0x11a0] sm:$0xff]
    %v649 = vld [vmem:[#allocation2 + $0x11a8] sm:$0xff]
    %v650 = vld [vmem:[#allocation2 + $0x11b0] sm:$0xff]
    %v651 = vld [vmem:[#allocation2 + $0x11b8] sm:$0xff]
    %v652 = vld [vmem:[#allocation2 + $0x11c0] sm:$0xff]
    %v653 = vld [vmem:[#allocation2 + $0x11c8] sm:$0xff]
    %v654 = vld [vmem:[#allocation2 + $0x11d0] sm:$0xff]
    %v655 = vld [vmem:[#allocation2 + $0x11d8] sm:$0xff]
    %v656 = vld [vmem:[#allocation2 + $0x11e0] sm:$0xff]
    %v657 = vld [vmem:[#allocation2 + $0x11e8] sm:$0xff]
    %v658 = vld [vmem:[#allocation2 + $0x11f0] sm:$0xff]
    %v659 = vld [vmem:[#allocation2 + $0x11f8] sm:$0xff]
    %v660 = vld [vmem:[#allocation2 + $0x1200] sm:$0xff]
    %v661 = vld [vmem:[#allocation2 + $0x1208] sm:$0xff]
    %v662 = vld [vmem:[#allocation2 + $0x1210] sm:$0xff]
    %v663 = vld [vmem:[#allocation2 + $0x1218] sm:$0xff]
    %v664 = vld [vmem:[#allocation2 + $0x1220] sm:$0xff]
    %v665 = vld [vmem:[#allocation2 + $0x1228] sm:$0xff]
    %v666 = vld [vmem:[#allocation2 + $0x1230] sm:$0xff]
    %v667 = vld [vmem:[#allocation2 + $0x1238] sm:$0xff]
    %v668 = vld [vmem:[#allocation2 + $0x1240] sm:$0xff]
    %v669 = vld [vmem:[#allocation2 + $0x1248] sm:$0xff]
    %v670 = vld [vmem:[#allocation2 + $0x1250] sm:$0xff]
    %v671 = vld [vmem:[#allocation2 + $0x1258] sm:$0xff]
    %v672 = vld [vmem:[#allocation2 + $0x1260] sm:$0xff]
    %v673 = vld [vmem:[#allocation2 + $0x1268] sm:$0xff]
    %v674 = vld [vmem:[#allocation2 + $0x1270] sm:$0xff]
    %v675 = vld [vmem:[#allocation2 + $0x1278] sm:$0xff]
    %v676 = vld [vmem:[#allocation2 + $0x1280] sm:$0xff]
    %v677 = vld [vmem:[#allocation2 + $0x1288] sm:$0xff]
    %v678 = vld [vmem:[#allocation2 + $0x1290] sm:$0xff]
    %v679 = vld [vmem:[#allocation2 + $0x1298] sm:$0xff]
    %v680 = vld [vmem:[#allocation2 + $0x12a0] sm:$0xff]
    %v681 = vld [vmem:[#allocation2 + $0x12a8] sm:$0xff]
    %v682 = vld [vmem:[#allocation2 + $0x12b0] sm:$0xff]
    %v683 = vld [vmem:[#allocation2 + $0x12b8] sm:$0xff]
    %v684 = vld [vmem:[#allocation2 + $0x12c0] sm:$0xff]
    %v685 = vld [vmem:[#allocation2 + $0x12c8] sm:$0xff]
    %v686 = vld [vmem:[#allocation2 + $0x12d0] sm:$0xff]
    %v687 = vld [vmem:[#allocation2 + $0x12d8] sm:$0xff]
    %v688 = vld [vmem:[#allocation2 + $0x12e0] sm:$0xff]
    %v689 = vld [vmem:[#allocation2 + $0x12e8] sm:$0xff]
    %v690 = vld [vmem:[#allocation2 + $0x12f0] sm:$0xff]
    %v691 = vld [vmem:[#allocation2 + $0x12f8] sm:$0xff]
    %v692 = vld [vmem:[#allocation2 + $0x1300] sm:$0xff]
    %v693 = vld [vmem:[#allocation2 + $0x1308] sm:$0xff]
    %v694 = vld [vmem:[#allocation2 + $0x1310] sm:$0xff]
    %v695 = vld [vmem:[#allocation2 + $0x1318] sm:$0xff]
    %v696 = vld [vmem:[#allocation2 + $0x1320] sm:$0xff]
    %v697 = vld [vmem:[#allocation2 + $0x1328] sm:$0xff]
    %v698 = vld [vmem:[#allocation2 + $0x1330] sm:$0xff]
    %v699 = vld [vmem:[#allocation2 + $0x1338] sm:$0xff]
    %v700 = vld [vmem:[#allocation2 + $0x1340] sm:$0xff]
    %v701 = vld [vmem:[#allocation2 + $0x1348] sm:$0xff]
    %v702 = vld [vmem:[#allocation2 + $0x1350] sm:$0xff]
    %v703 = vld [vmem:[#allocation2 + $0x1358] sm:$0xff]
    %v704 = vld [vmem:[#allocation2 + $0x1360] sm:$0xff]
    %v705 = vld [vmem:[#allocation2 + $0x1368] sm:$0xff]
    %v706 = vld [vmem:[#allocation2 + $0x1370] sm:$0xff]
    %v707 = vld [vmem:[#allocation2 + $0x1378] sm:$0xff]
    %v708 = vld [vmem:[#allocation2 + $0x1380] sm:$0xff]
    %v709 = vld [vmem:[#allocation2 + $0x1388] sm:$0xff]
    %v710 = vld [vmem:[#allocation2 + $0x1390] sm:$0xff]
    %v711 = vld [vmem:[#allocation2 + $0x1398] sm:$0xff]
    %v712 = vld [vmem:[#allocation2 + $0x13a0] sm:$0xff]
    %v713 = vld [vmem:[#allocation2 + $0x13a8] sm:$0xff]
    %v714 = vld [vmem:[#allocation2 + $0x13b0] sm:$0xff]
    %v715 = vld [vmem:[#allocation2 + $0x13b8] sm:$0xff]
    %v716 = vld [vmem:[#allocation2 + $0x13c0] sm:$0xff]
    %v717 = vld [vmem:[#allocation2 + $0x13c8] sm:$0xff]
    %v718 = vld [vmem:[#allocation2 + $0x13d0] sm:$0xff]
    %v719 = vld [vmem:[#allocation2 + $0x13d8] sm:$0xff]
    %v720 = vld [vmem:[#allocation2 + $0x13e0] sm:$0xff]
    %v721 = vld [vmem:[#allocation2 + $0x13e8] sm:$0xff]
    %v722 = vld [vmem:[#allocation2 + $0x13f0] sm:$0xff]
    %v723 = vld [vmem:[#allocation2 + $0x13f8] sm:$0xff]
    %v724 = vld [vmem:[#allocation2 + $0x1400] sm:$0xff]
    %v725 = vld [vmem:[#allocation2 + $0x1408] sm:$0xff]
    %v726 = vld [vmem:[#allocation2 + $0x1410] sm:$0xff]
    %v727 = vld [vmem:[#allocation2 + $0x1418] sm:$0xff]
    %v728 = vld [vmem:[#allocation2 + $0x1420] sm:$0xff]
    %v729 = vld [vmem:[#allocation2 + $0x1428] sm:$0xff]
    %v730 = vld [vmem:[#allocation2 + $0x1430] sm:$0xff]
    %v731 = vld [vmem:[#allocation2 + $0x1438] sm:$0xff]
    %v732 = vld [vmem:[#allocation2 + $0x1440] sm:$0xff]
    %v733 = vld [vmem:[#allocation2 + $0x1448] sm:$0xff]
    %v734 = vld [vmem:[#allocation2 + $0x1450] sm:$0xff]
    %v735 = vld [vmem:[#allocation2 + $0x1458] sm:$0xff]
    %v736 = vld [vmem:[#allocation2 + $0x1460] sm:$0xff]
    %v737 = vld [vmem:[#allocation2 + $0x1468] sm:$0xff]
    %v738 = vld [vmem:[#allocation2 + $0x1470] sm:$0xff]
    %v739 = vld [vmem:[#allocation2 + $0x1478] sm:$0xff]
    %v740 = vld [vmem:[#allocation2 + $0x1480] sm:$0xff]
    %v741 = vld [vmem:[#allocation2 + $0x1488] sm:$0xff]
    %v742 = vld [vmem:[#allocation2 + $0x1490] sm:$0xff]
    %v743 = vld [vmem:[#allocation2 + $0x1498] sm:$0xff]
    %v744 = vld [vmem:[#allocation2 + $0x14a0] sm:$0xff]
    %v745 = vld [vmem:[#allocation2 + $0x14a8] sm:$0xff]
    %v746 = vld [vmem:[#allocation2 + $0x14b0] sm:$0xff]
    %v747 = vld [vmem:[#allocation2 + $0x14b8] sm:$0xff]
    %v748 = vld [vmem:[#allocation2 + $0x14c0] sm:$0xff]
    %v749 = vld [vmem:[#allocation2 + $0x14c8] sm:$0xff]
    %v750 = vld [vmem:[#allocation2 + $0x14d0] sm:$0xff]
    %v751 = vld [vmem:[#allocation2 + $0x14d8] sm:$0xff]
    %v752 = vld [vmem:[#allocation2 + $0x14e0] sm:$0xff]
    %v753 = vld [vmem:[#allocation2 + $0x14e8] sm:$0xff]
    %v754 = vld [vmem:[#allocation2 + $0x14f0] sm:$0xff]
    %v755 = vld [vmem:[#allocation2 + $0x14f8] sm:$0xff]
    %v756 = vld [vmem:[#allocation2 + $0x1500] sm:$0xff]
    %v757 = vld [vmem:[#allocation2 + $0x1508] sm:$0xff]
    %v758 = vld [vmem:[#allocation2 + $0x1510] sm:$0xff]
    %v759 = vld [vmem:[#allocation2 + $0x1518] sm:$0xff]
    %v760 = vld [vmem:[#allocation2 + $0x1520] sm:$0xff]
    %v761 = vld [vmem:[#allocation2 + $0x1528] sm:$0xff]
    %v762 = vld [vmem:[#allocation2 + $0x1530] sm:$0xff]
    %v763 = vld [vmem:[#allocation2 + $0x1538] sm:$0xff]
    %v764 = vld [vmem:[#allocation2 + $0x1540] sm:$0xff]
    %v765 = vld [vmem:[#allocation2 + $0x1548] sm:$0xff]
    %v766 = vld [vmem:[#allocation2 + $0x1550] sm:$0xff]
    %v767 = vld [vmem:[#allocation2 + $0x1558] sm:$0xff]
    %v768 = vld [vmem:[#allocation2 + $0x1560] sm:$0xff]
    %v769 = vld [vmem:[#allocation2 + $0x1568] sm:$0xff]
    %v770 = vld [vmem:[#allocation2 + $0x1570] sm:$0xff]
    %v771 = vld [vmem:[#allocation2 + $0x1578] sm:$0xff]
    %v772 = vld [vmem:[#allocation2 + $0x1580] sm:$0xff]
    %v773 = vld [vmem:[#allocation2 + $0x1588] sm:$0xff]
    %v774 = vld [vmem:[#allocation2 + $0x1590] sm:$0xff]
    %v775 = vld [vmem:[#allocation2 + $0x1598] sm:$0xff]
    %v776 = vld [vmem:[#allocation2 + $0x15a0] sm:$0xff]
    %v777 = vld [vmem:[#allocation2 + $0x15a8] sm:$0xff]
    %v778 = vld [vmem:[#allocation2 + $0x15b0] sm:$0xff]
    %v779 = vld [vmem:[#allocation2 + $0x15b8] sm:$0xff]
    %v780 = vld [vmem:[#allocation2 + $0x15c0] sm:$0xff]
    %v781 = vld [vmem:[#allocation2 + $0x15c8] sm:$0xff]
    %v782 = vld [vmem:[#allocation2 + $0x15d0] sm:$0xff]
    %v783 = vld [vmem:[#allocation2 + $0x15d8] sm:$0xff]
    %v784 = vld [vmem:[#allocation2 + $0x15e0] sm:$0xff]
    %v785 = vld [vmem:[#allocation2 + $0x15e8] sm:$0xff]
    %v786 = vld [vmem:[#allocation2 + $0x15f0] sm:$0xff]
    %v787 = vld [vmem:[#allocation2 + $0x15f8] sm:$0xff]
    %v788 = vld [vmem:[#allocation2 + $0x1600] sm:$0xff]
    %v789 = vld [vmem:[#allocation2 + $0x1608] sm:$0xff]
    %v790 = vld [vmem:[#allocation2 + $0x1610] sm:$0xff]
    %v791 = vld [vmem:[#allocation2 + $0x1618] sm:$0xff]
    %v792 = vld [vmem:[#allocation2 + $0x1620] sm:$0xff]
    %v793 = vld [vmem:[#allocation2 + $0x1628] sm:$0xff]
    %v794 = vld [vmem:[#allocation2 + $0x1630] sm:$0xff]
    %v795 = vld [vmem:[#allocation2 + $0x1638] sm:$0xff]
    %v796 = vld [vmem:[#allocation2 + $0x1640] sm:$0xff]
    %v797 = vld [vmem:[#allocation2 + $0x1648] sm:$0xff]
    %v798 = vld [vmem:[#allocation2 + $0x1650] sm:$0xff]
    %v799 = vld [vmem:[#allocation2 + $0x1658] sm:$0xff]
    %v800 = vld [vmem:[#allocation2 + $0x1660] sm:$0xff]
    %v801 = vld [vmem:[#allocation2 + $0x1668] sm:$0xff]
    %v802 = vld [vmem:[#allocation2 + $0x1670] sm:$0xff]
    %v803 = vld [vmem:[#allocation2 + $0x1678] sm:$0xff]
    %v804 = vld [vmem:[#allocation2 + $0x1680] sm:$0xff]
    %v805 = vld [vmem:[#allocation2 + $0x1688] sm:$0xff]
    %v806 = vld [vmem:[#allocation2 + $0x1690] sm:$0xff]
    %v807 = vld [vmem:[#allocation2 + $0x1698] sm:$0xff]
    %v808 = vld [vmem:[#allocation2 + $0x16a0] sm:$0xff]
    %v809 = vld [vmem:[#allocation2 + $0x16a8] sm:$0xff]
    %v810 = vld [vmem:[#allocation2 + $0x16b0] sm:$0xff]
    %v811 = vld [vmem:[#allocation2 + $0x16b8] sm:$0xff]
    %v812 = vld [vmem:[#allocation2 + $0x16c0] sm:$0xff]
    %v813 = vld [vmem:[#allocation2 + $0x16c8] sm:$0xff]
    %v814 = vld [vmem:[#allocation2 + $0x16d0] sm:$0xff]
    %v815 = vld [vmem:[#allocation2 + $0x16d8] sm:$0xff]
    %v816 = vld [vmem:[#allocation2 + $0x16e0] sm:$0xff]
    %v817 = vld [vmem:[#allocation2 + $0x16e8] sm:$0xff]
    %v818 = vld [vmem:[#allocation2 + $0x16f0] sm:$0xff]
    %v819 = vld [vmem:[#allocation2 + $0x16f8] sm:$0xff]
    %v820 = vld [vmem:[#allocation2 + $0x1700] sm:$0xff]
    %v821 = vld [vmem:[#allocation2 + $0x1708] sm:$0xff]
    %v822 = vld [vmem:[#allocation2 + $0x1710] sm:$0xff]
    %v823 = vld [vmem:[#allocation2 + $0x1718] sm:$0xff]
    %v824 = vld [vmem:[#allocation2 + $0x1720] sm:$0xff]
    %v825 = vld [vmem:[#allocation2 + $0x1728] sm:$0xff]
    %v826 = vld [vmem:[#allocation2 + $0x1730] sm:$0xff]
    %v827 = vld [vmem:[#allocation2 + $0x1738] sm:$0xff]
    %v828 = vld [vmem:[#allocation2 + $0x1740] sm:$0xff]
    %v829 = vld [vmem:[#allocation2 + $0x1748] sm:$0xff]
    %v830 = vld [vmem:[#allocation2 + $0x1750] sm:$0xff]
    %v831 = vld [vmem:[#allocation2 + $0x1758] sm:$0xff]
    %v832 = vld [vmem:[#allocation2 + $0x1760] sm:$0xff]
    %v833 = vld [vmem:[#allocation2 + $0x1768] sm:$0xff]
    %v834 = vld [vmem:[#allocation2 + $0x1770] sm:$0xff]
    %v835 = vld [vmem:[#allocation2 + $0x1778] sm:$0xff]
    %v836 = vld [vmem:[#allocation2 + $0x1780] sm:$0xff]
    %v837 = vld [vmem:[#allocation2 + $0x1788] sm:$0xff]
    %v838 = vld [vmem:[#allocation2 + $0x1790] sm:$0xff]
    %v839 = vld [vmem:[#allocation2 + $0x1798] sm:$0xff]
    %v840 = vld [vmem:[#allocation2 + $0x17a0] sm:$0xff]
    %v841 = vld [vmem:[#allocation2 + $0x17a8] sm:$0xff]
    %v842 = vld [vmem:[#allocation2 + $0x17b0] sm:$0xff]
    %v843 = vld [vmem:[#allocation2 + $0x17b8] sm:$0xff]
    %v844 = vld [vmem:[#allocation2 + $0x17c0] sm:$0xff]
    %v845 = vld [vmem:[#allocation2 + $0x17c8] sm:$0xff]
    %v846 = vld [vmem:[#allocation2 + $0x17d0] sm:$0xff]
    %v847 = vld [vmem:[#allocation2 + $0x17d8] sm:$0xff]
    %v848 = vld [vmem:[#allocation2 + $0x17e0] sm:$0xff]
    %v849 = vld [vmem:[#allocation2 + $0x17e8] sm:$0xff]
    %v850 = vld [vmem:[#allocation2 + $0x17f0] sm:$0xff]
    %v851 = vld [vmem:[#allocation2 + $0x17f8] sm:$0xff]
    %v852 = vld [vmem:[#allocation2 + $0x1800] sm:$0xff]
    %v853 = vld [vmem:[#allocation2 + $0x1808] sm:$0xff]
    %v854 = vld [vmem:[#allocation2 + $0x1810] sm:$0xff]
    %v855 = vld [vmem:[#allocation2 + $0x1818] sm:$0xff]
    %v856 = vld [vmem:[#allocation2 + $0x1820] sm:$0xff]
    %v857 = vld [vmem:[#allocation2 + $0x1828] sm:$0xff]
    %v858 = vld [vmem:[#allocation2 + $0x1830] sm:$0xff]
    %v859 = vld [vmem:[#allocation2 + $0x1838] sm:$0xff]
    %v860 = vld [vmem:[#allocation2 + $0x1840] sm:$0xff]
    %v861 = vld [vmem:[#allocation2 + $0x1848] sm:$0xff]
    %v862 = vld [vmem:[#allocation2 + $0x1850] sm:$0xff]
    %v863 = vld [vmem:[#allocation2 + $0x1858] sm:$0xff]
    %v864 = vld [vmem:[#allocation2 + $0x1860] sm:$0xff]
    %v865 = vld [vmem:[#allocation2 + $0x1868] sm:$0xff]
    %v866 = vld [vmem:[#allocation2 + $0x1870] sm:$0xff]
    %v867 = vld [vmem:[#allocation2 + $0x1878] sm:$0xff]
    %v868 = vld [vmem:[#allocation2 + $0x1880] sm:$0xff]
    %v869 = vld [vmem:[#allocation2 + $0x1888] sm:$0xff]
    %v870 = vld [vmem:[#allocation2 + $0x1890] sm:$0xff]
    %v871 = vld [vmem:[#allocation2 + $0x1898] sm:$0xff]
    %v872 = vld [vmem:[#allocation2 + $0x18a0] sm:$0xff]
    %v873 = vld [vmem:[#allocation2 + $0x18a8] sm:$0xff]
    %v874 = vld [vmem:[#allocation2 + $0x18b0] sm:$0xff]
    %v875 = vld [vmem:[#allocation2 + $0x18b8] sm:$0xff]
    %v876 = vld [vmem:[#allocation2 + $0x18c0] sm:$0xff]
    %v877 = vld [vmem:[#allocation2 + $0x18c8] sm:$0xff]
    %v878 = vld [vmem:[#allocation2 + $0x18d0] sm:$0xff]
    %v879 = vld [vmem:[#allocation2 + $0x18d8] sm:$0xff]
    %v880 = vld [vmem:[#allocation2 + $0x18e0] sm:$0xff]
    %v881 = vld [vmem:[#allocation2 + $0x18e8] sm:$0xff]
    %v882 = vld [vmem:[#allocation2 + $0x18f0] sm:$0xff]
    %v883 = vld [vmem:[#allocation2 + $0x18f8] sm:$0xff]
    %v884 = vld [vmem:[#allocation4] sm:$0xf]
    %v886 = vlaneseq
    %v887 = vshrl.u32 %v886, 7
    %v888 = vsub.s32 0, %v887
    %v889 = vrot.slane %v884, %v888
    %v890 = vlaneseq
    %v891 = vshrl.u32 %v890, 7
    %v892 = vsub.s32 1, %v891
    %v893 = vrot.slane %v884, %v892
    %v894 = vlaneseq
    %v895 = vshrl.u32 %v894, 7
    %v896 = vsub.s32 2, %v895
    %v897 = vrot.slane %v884, %v896
    %v898 = vlaneseq
    %v899 = vshrl.u32 %v898, 7
    %v900 = vsub.s32 3, %v899
    %v901 = vrot.slane %v884, %v900
    %vm906 = vcmask 523264
    %v908 = vsel %vm906, %v83, 0
    %910 = vmatprep.subr.mxu0 %v85
    %911 = vmatpush1.msra.mxu0 %v84
    %912 = vmatprep.subr.mxu0 %v89
    %913 = vmatpush1.msra.mxu0 %v88
    %914 = vmatprep.subr.mxu0 %v93
    %915 = vmatpush1.msra.mxu0 %v92
    %916 = vmatprep.subr.mxu0 %v97
    %917 = vmatpush1.msra.mxu0 %v96
    %918 = vmatprep.subr.mxu0 %v101
    %919 = vmatpush1.msra.mxu0 %v100
    %920 = vmatprep.subr.mxu0 %v105
    %921 = vmatpush1.msra.mxu0 %v104
    %922 = vmatprep.subr.mxu0 %v109
    %923 = vmatpush1.msra.mxu0 %v108
    %924 = vmatprep.subr.mxu0 %v113
    %925 = vmatpush1.msra.mxu0 %v112
    %926 = vmatprep.subr.mxu0 %v117
    %927 = vmatpush1.msra.mxu0 %v116
    %928 = vmatprep.subr.mxu0 %v121
    %929 = vmatpush1.msra.mxu0 %v120
    %930 = vmatprep.subr.mxu0 %v125
    %931 = vmatpush1.msra.mxu0 %v124
    %932 = vmatprep.subr.mxu0 %v129
    %933 = vmatpush1.msra.mxu0 %v128
    %934 = vmatprep.subr.mxu0 %v133
    %935 = vmatpush1.msra.mxu0 %v132
    %936 = vmatprep.subr.mxu0 %v137
    %937 = vmatpush1.msra.mxu0 %v136
    %938 = vmatprep.subr.mxu0 %v141
    %939 = vmatpush1.msra.mxu0 %v140
    %940 = vmatprep.subr.mxu0 %v145
    %941 = vmatpush1.msra.mxu0 %v144
    %942 = vmatprep.subr.mxu0 %v149
    %943 = vmatpush1.msra.mxu0 %v148
    %944 = vmatprep.subr.mxu0 %v153
    %945 = vmatpush1.msra.mxu0 %v152
    %946 = vmatprep.subr.mxu0 %v157
    %947 = vmatpush1.msra.mxu0 %v156
    %948 = vmatprep.subr.mxu0 %v161
    %949 = vmatpush1.msra.mxu0 %v160
    %950 = vmatprep.subr.mxu0 %v165
    %951 = vmatpush1.msra.mxu0 %v164
    %952 = vmatprep.subr.mxu0 %v169
    %953 = vmatpush1.msra.mxu0 %v168
    %954 = vmatprep.subr.mxu0 %v173
    %955 = vmatpush1.msra.mxu0 %v172
    %956 = vmatprep.subr.mxu0 %v177
    %957 = vmatpush1.msra.mxu0 %v176
    %958 = vmatprep.subr.mxu0 %v181
    %959 = vmatpush1.msra.mxu0 %v180
    %960 = vmatprep.subr.mxu0 %v185
    %961 = vmatpush1.msra.mxu0 %v184
    %962 = vmatprep.subr.mxu0 %v189
    %963 = vmatpush1.msra.mxu0 %v188
    %964 = vmatprep.subr.mxu0 %v193
    %965 = vmatpush1.msra.mxu0 %v192
    %966 = vmatprep.subr.mxu0 %v197
    %967 = vmatpush1.msra.mxu0 %v196
    %968 = vmatprep.subr.mxu0 %v201
    %969 = vmatpush1.msra.mxu0 %v200
    %970 = vmatprep.subr.mxu0 %v205
    %971 = vmatpush1.msra.mxu0 %v204
    %972 = vmatprep.subr.mxu0 %v209
    %973 = vmatpush1.msra.mxu0 %v208
    %974 = vmatprep.mubr.f32.mxu0 %v72
    %975 = vmatmul.mubr.f32.gmra.mrb[0].mxu0 %v71
    %v976 = vpop.f32.mrb[0].mxu0
    %v977 = vadd.f32 %v889, %v976
    %v978 = vpop.f32.mrb[0].mxu0
    %v979 = vadd.f32 %v893, %v978
    %980 = vdwg.mxu0
    %981 = vmatprep.subr.mxu0 %v213
    %982 = vmatpush1.msra.mxu0 %v212
    %983 = vmatprep.subr.mxu0 %v217
    %984 = vmatpush1.msra.mxu0 %v216
    %985 = vmatprep.subr.mxu0 %v221
    %986 = vmatpush1.msra.mxu0 %v220
    %987 = vmatprep.subr.mxu0 %v225
    %988 = vmatpush1.msra.mxu0 %v224
    %989 = vmatprep.subr.mxu0 %v229
    %990 = vmatpush1.msra.mxu0 %v228
    %991 = vmatprep.subr.mxu0 %v233
    %992 = vmatpush1.msra.mxu0 %v232
    %993 = vmatprep.subr.mxu0 %v237
    %994 = vmatpush1.msra.mxu0 %v236
    %995 = vmatprep.subr.mxu0 %v241
    %996 = vmatpush1.msra.mxu0 %v240
    %997 = vmatprep.subr.mxu0 %v245
    %998 = vmatpush1.msra.mxu0 %v244
    %999 = vmatprep.subr.mxu0 %v249
    %1000 = vmatpush1.msra.mxu0 %v248
    %1001 = vmatprep.subr.mxu0 %v253
    %1002 = vmatpush1.msra.mxu0 %v252
    %1003 = vmatprep.subr.mxu0 %v257
    %1004 = vmatpush1.msra.mxu0 %v256
    %1005 = vmatprep.subr.mxu0 %v261
    %1006 = vmatpush1.msra.mxu0 %v260
    %1007 = vmatprep.subr.mxu0 %v265
    %1008 = vmatpush1.msra.mxu0 %v264
    %1009 = vmatprep.subr.mxu0 %v269
    %1010 = vmatpush1.msra.mxu0 %v268
    %1011 = vmatprep.subr.mxu0 %v273
    %1012 = vmatpush1.msra.mxu0 %v272
    %1013 = vmatprep.subr.mxu0 %v277
    %1014 = vmatpush1.msra.mxu0 %v276
    %1015 = vmatprep.subr.mxu0 %v281
    %1016 = vmatpush1.msra.mxu0 %v280
    %1017 = vmatprep.subr.mxu0 %v285
    %1018 = vmatpush1.msra.mxu0 %v284
    %1019 = vmatprep.subr.mxu0 %v289
    %1020 = vmatpush1.msra.mxu0 %v288
    %1021 = vmatprep.subr.mxu0 %v293
    %1022 = vmatpush1.msra.mxu0 %v292
    %1023 = vmatprep.subr.mxu0 %v297
    %1024 = vmatpush1.msra.mxu0 %v296
    %1025 = vmatprep.subr.mxu0 %v301
    %1026 = vmatpush1.msra.mxu0 %v300
    %1027 = vmatprep.subr.mxu0 %v305
    %1028 = vmatpush1.msra.mxu0 %v304
    %1029 = vmatprep.subr.mxu0 %v309
    %1030 = vmatpush1.msra.mxu0 %v308
    %1031 = vmatprep.subr.mxu0 %v313
    %1032 = vmatpush1.msra.mxu0 %v312
    %1033 = vmatprep.subr.mxu0 %v317
    %1034 = vmatpush1.msra.mxu0 %v316
    %1035 = vmatprep.subr.mxu0 %v321
    %1036 = vmatpush1.msra.mxu0 %v320
    %1037 = vmatprep.subr.mxu0 %v325
    %1038 = vmatpush1.msra.mxu0 %v324
    %1039 = vmatprep.subr.mxu0 %v329
    %1040 = vmatpush1.msra.mxu0 %v328
    %1041 = vmatprep.subr.mxu0 %v333
    %1042 = vmatpush1.msra.mxu0 %v332
    %1043 = vmatprep.subr.mxu0 %v337
    %1044 = vmatpush1.msra.mxu0 %v336
    %1045 = vmatprep.mubr.f32.mxu0 %v74
    %1046 = vmatmul.mubr.f32.gmra.mrb[0].mxu0 %v73
    %v1047 = vpop.f32.mrb[0].mxu0
    %v1048 = vadd.f32 %v977, %v1047
    %v1049 = vpop.f32.mrb[0].mxu0
    %v1050 = vadd.f32 %v979, %v1049
    %1051 = vdwg.mxu0
    %1052 = vmatprep.subr.mxu0 %v341
    %1053 = vmatpush1.msra.mxu0 %v340
    %1054 = vmatprep.subr.mxu0 %v345
    %1055 = vmatpush1.msra.mxu0 %v344
    %1056 = vmatprep.subr.mxu0 %v349
    %1057 = vmatpush1.msra.mxu0 %v348
    %1058 = vmatprep.subr.mxu0 %v353
    %1059 = vmatpush1.msra.mxu0 %v352
    %1060 = vmatprep.subr.mxu0 %v357
    %1061 = vmatpush1.msra.mxu0 %v356
    %1062 = vmatprep.subr.mxu0 %v361
    %1063 = vmatpush1.msra.mxu0 %v360
    %1064 = vmatprep.subr.mxu0 %v365
    %1065 = vmatpush1.msra.mxu0 %v364
    %1066 = vmatprep.subr.mxu0 %v369
    %1067 = vmatpush1.msra.mxu0 %v368
    %1068 = vmatprep.subr.mxu0 %v373
    %1069 = vmatpush1.msra.mxu0 %v372
    %1070 = vmatprep.subr.mxu0 %v377
    %1071 = vmatpush1.msra.mxu0 %v376
    %1072 = vmatprep.subr.mxu0 %v381
    %1073 = vmatpush1.msra.mxu0 %v380
    %1074 = vmatprep.subr.mxu0 %v385
    %1075 = vmatpush1.msra.mxu0 %v384
    %1076 = vmatprep.subr.mxu0 %v389
    %1077 = vmatpush1.msra.mxu0 %v388
    %1078 = vmatprep.subr.mxu0 %v393
    %1079 = vmatpush1.msra.mxu0 %v392
    %1080 = vmatprep.subr.mxu0 %v397
    %1081 = vmatpush1.msra.mxu0 %v396
    %1082 = vmatprep.subr.mxu0 %v401
    %1083 = vmatpush1.msra.mxu0 %v400
    %1084 = vmatprep.subr.mxu0 %v405
    %1085 = vmatpush1.msra.mxu0 %v404
    %1086 = vmatprep.subr.mxu0 %v409
    %1087 = vmatpush1.msra.mxu0 %v408
    %1088 = vmatprep.subr.mxu0 %v413
    %1089 = vmatpush1.msra.mxu0 %v412
    %1090 = vmatprep.subr.mxu0 %v417
    %1091 = vmatpush1.msra.mxu0 %v416
    %1092 = vmatprep.subr.mxu0 %v421
    %1093 = vmatpush1.msra.mxu0 %v420
    %1094 = vmatprep.subr.mxu0 %v425
    %1095 = vmatpush1.msra.mxu0 %v424
    %1096 = vmatprep.subr.mxu0 %v429
    %1097 = vmatpush1.msra.mxu0 %v428
    %1098 = vmatprep.subr.mxu0 %v433
    %1099 = vmatpush1.msra.mxu0 %v432
    %1100 = vmatprep.subr.mxu0 %v437
    %1101 = vmatpush1.msra.mxu0 %v436
    %1102 = vmatprep.subr.mxu0 %v441
    %1103 = vmatpush1.msra.mxu0 %v440
    %1104 = vmatprep.subr.mxu0 %v445
    %1105 = vmatpush1.msra.mxu0 %v444
    %1106 = vmatprep.subr.mxu0 %v449
    %1107 = vmatpush1.msra.mxu0 %v448
    %1108 = vmatprep.subr.mxu0 %v453
    %1109 = vmatpush1.msra.mxu0 %v452
    %1110 = vmatprep.subr.mxu0 %v457
    %1111 = vmatpush1.msra.mxu0 %v456
    %1112 = vmatprep.subr.mxu0 %v461
    %1113 = vmatpush1.msra.mxu0 %v460
    %1114 = vmatprep.subr.mxu0 %v465
    %1115 = vmatpush1.msra.mxu0 %v464
    %1116 = vmatprep.mubr.f32.mxu0 %v76
    %1117 = vmatmul.mubr.f32.gmra.mrb[0].mxu0 %v75
    %v1118 = vpop.f32.mrb[0].mxu0
    %v1119 = vadd.f32 %v1048, %v1118
    %v1120 = vpop.f32.mrb[0].mxu0
    %v1121 = vadd.f32 %v1050, %v1120
    %1122 = vdwg.mxu0
    %1123 = vmatprep.subr.mxu0 %v469
    %1124 = vmatpush1.msra.mxu0 %v468
    %1125 = vmatprep.subr.mxu0 %v473
    %1126 = vmatpush1.msra.mxu0 %v472
    %1127 = vmatprep.subr.mxu0 %v477
    %1128 = vmatpush1.msra.mxu0 %v476
    %1129 = vmatprep.subr.mxu0 %v481
    %1130 = vmatpush1.msra.mxu0 %v480
    %1131 = vmatprep.subr.mxu0 %v485
    %1132 = vmatpush1.msra.mxu0 %v484
    %1133 = vmatprep.subr.mxu0 %v489
    %1134 = vmatpush1.msra.mxu0 %v488
    %1135 = vmatprep.subr.mxu0 %v493
    %1136 = vmatpush1.msra.mxu0 %v492
    %1137 = vmatprep.subr.mxu0 %v497
    %1138 = vmatpush1.msra.mxu0 %v496
    %1139 = vmatprep.subr.mxu0 %v501
    %1140 = vmatpush1.msra.mxu0 %v500
    %1141 = vmatprep.subr.mxu0 %v505
    %1142 = vmatpush1.msra.mxu0 %v504
    %1143 = vmatprep.subr.mxu0 %v509
    %1144 = vmatpush1.msra.mxu0 %v508
    %1145 = vmatprep.subr.mxu0 %v513
    %1146 = vmatpush1.msra.mxu0 %v512
    %1147 = vmatprep.subr.mxu0 %v517
    %1148 = vmatpush1.msra.mxu0 %v516
    %1149 = vmatprep.subr.mxu0 %v521
    %1150 = vmatpush1.msra.mxu0 %v520
    %1151 = vmatprep.subr.mxu0 %v525
    %1152 = vmatpush1.msra.mxu0 %v524
    %1153 = vmatprep.subr.mxu0 %v529
    %1154 = vmatpush1.msra.mxu0 %v528
    %1155 = vmatprep.subr.mxu0 %v533
    %1156 = vmatpush1.msra.mxu0 %v532
    %1157 = vmatprep.subr.mxu0 %v537
    %1158 = vmatpush1.msra.mxu0 %v536
    %1159 = vmatprep.subr.mxu0 %v541
    %1160 = vmatpush1.msra.mxu0 %v540
    %1161 = vmatprep.subr.mxu0 %v545
    %1162 = vmatpush1.msra.mxu0 %v544
    %1163 = vmatprep.subr.mxu0 %v549
    %1164 = vmatpush1.msra.mxu0 %v548
    %1165 = vmatprep.subr.mxu0 %v553
    %1166 = vmatpush1.msra.mxu0 %v552
    %1167 = vmatprep.subr.mxu0 %v557
    %1168 = vmatpush1.msra.mxu0 %v556
    %1169 = vmatprep.subr.mxu0 %v561
    %1170 = vmatpush1.msra.mxu0 %v560
    %1171 = vmatprep.subr.mxu0 %v565
    %1172 = vmatpush1.msra.mxu0 %v564
    %1173 = vmatprep.subr.mxu0 %v569
    %1174 = vmatpush1.msra.mxu0 %v568
    %1175 = vmatprep.subr.mxu0 %v573
    %1176 = vmatpush1.msra.mxu0 %v572
    %1177 = vmatprep.subr.mxu0 %v577
    %1178 = vmatpush1.msra.mxu0 %v576
    %1179 = vmatprep.subr.mxu0 %v581
    %1180 = vmatpush1.msra.mxu0 %v580
    %1181 = vmatprep.subr.mxu0 %v585
    %1182 = vmatpush1.msra.mxu0 %v584
    %1183 = vmatprep.subr.mxu0 %v589
    %1184 = vmatpush1.msra.mxu0 %v588
    %1185 = vmatprep.subr.mxu0 %v593
    %1186 = vmatpush1.msra.mxu0 %v592
    %1187 = vmatprep.mubr.f32.mxu0 %v78
    %1188 = vmatmul.mubr.f32.gmra.mrb[0].mxu0 %v77
    %v1189 = vpop.f32.mrb[0].mxu0
    %v1190 = vadd.f32 %v1119, %v1189
    %v1191 = vpop.f32.mrb[0].mxu0
    %v1192 = vadd.f32 %v1121, %v1191
    %1193 = vdwg.mxu0
    %1194 = vmatprep.subr.mxu0 %v597
    %1195 = vmatpush1.msra.mxu0 %v596
    %1196 = vmatprep.subr.mxu0 %v601
    %1197 = vmatpush1.msra.mxu0 %v600
    %1198 = vmatprep.subr.mxu0 %v605
    %1199 = vmatpush1.msra.mxu0 %v604
    %1200 = vmatprep.subr.mxu0 %v609
    %1201 = vmatpush1.msra.mxu0 %v608
    %1202 = vmatprep.subr.mxu0 %v613
    %1203 = vmatpush1.msra.mxu0 %v612
    %1204 = vmatprep.subr.mxu0 %v617
    %1205 = vmatpush1.msra.mxu0 %v616
    %1206 = vmatprep.subr.mxu0 %v621
    %1207 = vmatpush1.msra.mxu0 %v620
    %1208 = vmatprep.subr.mxu0 %v625
    %1209 = vmatpush1.msra.mxu0 %v624
    %1210 = vmatprep.subr.mxu0 %v629
    %1211 = vmatpush1.msra.mxu0 %v628
    %1212 = vmatprep.subr.mxu0 %v633
    %1213 = vmatpush1.msra.mxu0 %v632
    %1214 = vmatprep.subr.mxu0 %v637
    %1215 = vmatpush1.msra.mxu0 %v636
    %1216 = vmatprep.subr.mxu0 %v641
    %1217 = vmatpush1.msra.mxu0 %v640
    %1218 = vmatprep.subr.mxu0 %v645
    %1219 = vmatpush1.msra.mxu0 %v644
    %1220 = vmatprep.subr.mxu0 %v649
    %1221 = vmatpush1.msra.mxu0 %v648
    %1222 = vmatprep.subr.mxu0 %v653
    %1223 = vmatpush1.msra.mxu0 %v652
    %1224 = vmatprep.subr.mxu0 %v657
    %1225 = vmatpush1.msra.mxu0 %v656
    %1226 = vmatprep.subr.mxu0 %v661
    %1227 = vmatpush1.msra.mxu0 %v660
    %1228 = vmatprep.subr.mxu0 %v665
    %1229 = vmatpush1.msra.mxu0 %v664
    %1230 = vmatprep.subr.mxu0 %v669
    %1231 = vmatpush1.msra.mxu0 %v668
    %1232 = vmatprep.subr.mxu0 %v673
    %1233 = vmatpush1.msra.mxu0 %v672
    %1234 = vmatprep.subr.mxu0 %v677
    %1235 = vmatpush1.msra.mxu0 %v676
    %1236 = vmatprep.subr.mxu0 %v681
    %1237 = vmatpush1.msra.mxu0 %v680
    %1238 = vmatprep.subr.mxu0 %v685
    %1239 = vmatpush1.msra.mxu0 %v684
    %1240 = vmatprep.subr.mxu0 %v689
    %1241 = vmatpush1.msra.mxu0 %v688
    %1242 = vmatprep.subr.mxu0 %v693
    %1243 = vmatpush1.msra.mxu0 %v692
    %1244 = vmatprep.subr.mxu0 %v697
    %1245 = vmatpush1.msra.mxu0 %v696
    %1246 = vmatprep.subr.mxu0 %v701
    %1247 = vmatpush1.msra.mxu0 %v700
    %1248 = vmatprep.subr.mxu0 %v705
    %1249 = vmatpush1.msra.mxu0 %v704
    %1250 = vmatprep.subr.mxu0 %v709
    %1251 = vmatpush1.msra.mxu0 %v708
    %1252 = vmatprep.subr.mxu0 %v713
    %1253 = vmatpush1.msra.mxu0 %v712
    %1254 = vmatprep.subr.mxu0 %v717
    %1255 = vmatpush1.msra.mxu0 %v716
    %1256 = vmatprep.subr.mxu0 %v721
    %1257 = vmatpush1.msra.mxu0 %v720
    %1258 = vmatprep.mubr.f32.mxu0 %v80
    %1259 = vmatmul.mubr.f32.gmra.mrb[0].mxu0 %v79
    %v1260 = vpop.f32.mrb[0].mxu0
    %v1261 = vadd.f32 %v1190, %v1260
    %v1262 = vpop.f32.mrb[0].mxu0
    %v1263 = vadd.f32 %v1192, %v1262
    %1264 = vdwg.mxu0
    %1265 = vmatprep.subr.mxu0 %v725
    %1266 = vmatpush1.msra.mxu0 %v724
    %1267 = vmatprep.subr.mxu0 %v729
    %1268 = vmatpush1.msra.mxu0 %v728
    %1269 = vmatprep.subr.mxu0 %v733
    %1270 = vmatpush1.msra.mxu0 %v732
    %1271 = vmatprep.subr.mxu0 %v737
    %1272 = vmatpush1.msra.mxu0 %v736
    %1273 = vmatprep.subr.mxu0 %v741
    %1274 = vmatpush1.msra.mxu0 %v740
    %1275 = vmatprep.subr.mxu0 %v745
    %1276 = vmatpush1.msra.mxu0 %v744
    %1277 = vmatprep.subr.mxu0 %v749
    %1278 = vmatpush1.msra.mxu0 %v748
    %1279 = vmatprep.subr.mxu0 %v753
    %1280 = vmatpush1.msra.mxu0 %v752
    %1281 = vmatprep.subr.mxu0 %v757
    %1282 = vmatpush1.msra.mxu0 %v756
    %1283 = vmatprep.subr.mxu0 %v761
    %1284 = vmatpush1.msra.mxu0 %v760
    %1285 = vmatprep.subr.mxu0 %v765
    %1286 = vmatpush1.msra.mxu0 %v764
    %1287 = vmatprep.subr.mxu0 %v769
    %1288 = vmatpush1.msra.mxu0 %v768
    %1289 = vmatprep.subr.mxu0 %v773
    %1290 = vmatpush1.msra.mxu0 %v772
    %1291 = vmatprep.subr.mxu0 %v777
    %1292 = vmatpush1.msra.mxu0 %v776
    %1293 = vmatprep.subr.mxu0 %v781
    %1294 = vmatpush1.msra.mxu0 %v780
    %1295 = vmatprep.subr.mxu0 %v785
    %1296 = vmatpush1.msra.mxu0 %v784
    %1297 = vmatprep.subr.mxu0 %v789
    %1298 = vmatpush1.msra.mxu0 %v788
    %1299 = vmatprep.subr.mxu0 %v793
    %1300 = vmatpush1.msra.mxu0 %v792
    %1301 = vmatprep.subr.mxu0 %v797
    %1302 = vmatpush1.msra.mxu0 %v796
    %1303 = vmatprep.subr.mxu0 %v801
    %1304 = vmatpush1.msra.mxu0 %v800
    %1305 = vmatprep.subr.mxu0 %v805
    %1306 = vmatpush1.msra.mxu0 %v804
    %1307 = vmatprep.subr.mxu0 %v809
    %1308 = vmatpush1.msra.mxu0 %v808
    %1309 = vmatprep.subr.mxu0 %v813
    %1310 = vmatpush1.msra.mxu0 %v812
    %1311 = vmatprep.subr.mxu0 %v817
    %1312 = vmatpush1.msra.mxu0 %v816
    %1313 = vmatprep.subr.mxu0 %v821
    %1314 = vmatpush1.msra.mxu0 %v820
    %1315 = vmatprep.subr.mxu0 %v825
    %1316 = vmatpush1.msra.mxu0 %v824
    %1317 = vmatprep.subr.mxu0 %v829
    %1318 = vmatpush1.msra.mxu0 %v828
    %1319 = vmatprep.subr.mxu0 %v833
    %1320 = vmatpush1.msra.mxu0 %v832
    %1321 = vmatprep.subr.mxu0 %v837
    %1322 = vmatpush1.msra.mxu0 %v836
    %1323 = vmatprep.subr.mxu0 %v841
    %1324 = vmatpush1.msra.mxu0 %v840
    %1325 = vmatprep.subr.mxu0 %v845
    %1326 = vmatpush1.msra.mxu0 %v844
    %1327 = vmatprep.subr.mxu0 %v849
    %1328 = vmatpush1.msra.mxu0 %v848
    %1329 = vmatprep.mubr.f32.mxu0 %v82
    %1330 = vmatmul.mubr.f32.gmra.mrb[0].mxu0 %v81
    %v1331 = vpop.f32.mrb[0].mxu0
    %v1332 = vadd.f32 %v1261, %v1331
    %v1333 = vpop.f32.mrb[0].mxu0
    %v1334 = vadd.f32 %v1263, %v1333
    %1335 = vdwg.mxu0
    %1336 = vmatprep.subr.mxu0 %v853
    %1337 = vmatpush1.msra.mxu0 %v852
    %1338 = vmatprep.subr.mxu0 %v857
    %1339 = vmatpush1.msra.mxu0 %v856
    %1340 = vmatprep.subr.mxu0 %v861
    %1341 = vmatpush1.msra.mxu0 %v860
    %1342 = vmatprep.subr.mxu0 %v865
    %1343 = vmatpush1.msra.mxu0 %v864
    %1344 = vmatprep.subr.mxu0 %v869
    %1345 = vmatpush1.msra.mxu0 %v868
    %1346 = vmatprep.subr.mxu0 %v873
    %1347 = vmatpush1.msra.mxu0 %v872
    %1348 = vmatprep.subr.mxu0 %v877
    %1349 = vmatpush1.msra.mxu0 %v876
    %1350 = vmatprep.subr.mxu0 %v881
    %1351 = vmatpush1.msra.mxu0 %v880
    %1352 = vmatprep.subr.mxu0 0.0
    %1353 = vmatpush1.msra.mxu0 0.0
    %1354 = vmatprep.subr.mxu0 0.0
    %1355 = vmatpush1.msra.mxu0 0.0
    %1356 = vmatprep.subr.mxu0 0.0
    %1357 = vmatpush1.msra.mxu0 0.0
    %1358 = vmatprep.subr.mxu0 0.0
    %1359 = vmatpush1.msra.mxu0 0.0
    %1360 = vmatprep.subr.mxu0 0.0
    %1361 = vmatpush1.msra.mxu0 0.0
    %1362 = vmatprep.subr.mxu0 0.0
    %1363 = vmatpush1.msra.mxu0 0.0
    %1364 = vmatprep.subr.mxu0 0.0
    %1365 = vmatpush1.msra.mxu0 0.0
    %1366 = vmatprep.subr.mxu0 0.0
    %1367 = vmatpush1.msra.mxu0 0.0
    %1368 = vmatprep.subr.mxu0 0.0
    %1369 = vmatpush1.msra.mxu0 0.0
    %1370 = vmatprep.subr.mxu0 0.0
    %1371 = vmatpush1.msra.mxu0 0.0
    %1372 = vmatprep.subr.mxu0 0.0
    %1373 = vmatpush1.msra.mxu0 0.0
    %1374 = vmatprep.subr.mxu0 0.0
    %1375 = vmatpush1.msra.mxu0 0.0
    %1376 = vmatprep.subr.mxu0 0.0
    %1377 = vmatpush1.msra.mxu0 0.0
    %1378 = vmatprep.subr.mxu0 0.0
    %1379 = vmatpush1.msra.mxu0 0.0
    %1380 = vmatprep.subr.mxu0 0.0
    %1381 = vmatpush1.msra.mxu0 0.0
    %1382 = vmatprep.subr.mxu0 0.0
    %1383 = vmatpush1.msra.mxu0 0.0
    %1384 = vmatprep.subr.mxu0 0.0
    %1385 = vmatpush1.msra.mxu0 0.0
    %1386 = vmatprep.subr.mxu0 0.0
    %1387 = vmatpush1.msra.mxu0 0.0
    %1388 = vmatprep.subr.mxu0 0.0
    %1389 = vmatpush1.msra.mxu0 0.0
    %1390 = vmatprep.subr.mxu0 0.0
    %1391 = vmatpush1.msra.mxu0 0.0
    %1392 = vmatprep.subr.mxu0 0.0
    %1393 = vmatpush1.msra.mxu0 0.0
    %1394 = vmatprep.subr.mxu0 0.0
    %1395 = vmatpush1.msra.mxu0 0.0
    %1396 = vmatprep.subr.mxu0 0.0
    %1397 = vmatpush1.msra.mxu0 0.0
    %1398 = vmatprep.subr.mxu0 0.0
    %1399 = vmatpush1.msra.mxu0 0.0
    %1400 = vmatprep.mubr.f32.mxu0 0.0
    %1401 = vmatmul.mubr.f32.gmra.mrb[0].mxu0 %v908
    %v1402 = vpop.f32.mrb[0].mxu0
    %v1403 = vadd.f32 %v1332, %v1402
    %v1404 = vpop.f32.mrb[0].mxu0
    %v1405 = vadd.f32 %v1334, %v1404
    %1406 = vdwg.mxu0
    %1407 = vmatprep.subr.mxu0 %v87
    %1408 = vmatpush1.msra.mxu0 %v86
    %1409 = vmatprep.subr.mxu0 %v91
    %1410 = vmatpush1.msra.mxu0 %v90
    %1411 = vmatprep.subr.mxu0 %v95
    %1412 = vmatpush1.msra.mxu0 %v94
    %1413 = vmatprep.subr.mxu0 %v99
    %1414 = vmatpush1.msra.mxu0 %v98
    %1415 = vmatprep.subr.mxu0 %v103
    %1416 = vmatpush1.msra.mxu0 %v102
    %1417 = vmatprep.subr.mxu0 %v107
    %1418 = vmatpush1.msra.mxu0 %v106
    %1419 = vmatprep.subr.mxu0 %v111
    %1420 = vmatpush1.msra.mxu0 %v110
    %1421 = vmatprep.subr.mxu0 %v115
    %1422 = vmatpush1.msra.mxu0 %v114
    %1423 = vmatprep.subr.mxu0 %v119
    %1424 = vmatpush1.msra.mxu0 %v118
    %1425 = vmatprep.subr.mxu0 %v123
    %1426 = vmatpush1.msra.mxu0 %v122
    %1427 = vmatprep.subr.mxu0 %v127
    %1428 = vmatpush1.msra.mxu0 %v126
    %1429 = vmatprep.subr.mxu0 %v131
    %1430 = vmatpush1.msra.mxu0 %v130
    %1431 = vmatprep.subr.mxu0 %v135
    %1432 = vmatpush1.msra.mxu0 %v134
    %1433 = vmatprep.subr.mxu0 %v139
    %1434 = vmatpush1.msra.mxu0 %v138
    %1435 = vmatprep.subr.mxu0 %v143
    %1436 = vmatpush1.msra.mxu0 %v142
    %1437 = vmatprep.subr.mxu0 %v147
    %1438 = vmatpush1.msra.mxu0 %v146
    %1439 = vmatprep.subr.mxu0 %v151
    %1440 = vmatpush1.msra.mxu0 %v150
    %1441 = vmatprep.subr.mxu0 %v155
    %1442 = vmatpush1.msra.mxu0 %v154
    %1443 = vmatprep.subr.mxu0 %v159
    %1444 = vmatpush1.msra.mxu0 %v158
    %1445 = vmatprep.subr.mxu0 %v163
    %1446 = vmatpush1.msra.mxu0 %v162
    %1447 = vmatprep.subr.mxu0 %v167
    %1448 = vmatpush1.msra.mxu0 %v166
    %1449 = vmatprep.subr.mxu0 %v171
    %1450 = vmatpush1.msra.mxu0 %v170
    %1451 = vmatprep.subr.mxu0 %v175
    %1452 = vmatpush1.msra.mxu0 %v174
    %1453 = vmatprep.subr.mxu0 %v179
    %1454 = vmatpush1.msra.mxu0 %v178
    %1455 = vmatprep.subr.mxu0 %v183
    %1456 = vmatpush1.msra.mxu0 %v182
    %1457 = vmatprep.subr.mxu0 %v187
    %1458 = vmatpush1.msra.mxu0 %v186
    %1459 = vmatprep.subr.mxu0 %v191
    %1460 = vmatpush1.msra.mxu0 %v190
    %1461 = vmatprep.subr.mxu0 %v195
    %1462 = vmatpush1.msra.mxu0 %v194
    %1463 = vmatprep.subr.mxu0 %v199
    %1464 = vmatpush1.msra.mxu0 %v198
    %1465 = vmatprep.subr.mxu0 %v203
    %1466 = vmatpush1.msra.mxu0 %v202
    %1467 = vmatprep.subr.mxu0 %v207
    %1468 = vmatpush1.msra.mxu0 %v206
    %1469 = vmatprep.subr.mxu0 %v211
    %1470 = vmatpush1.msra.mxu0 %v210
    %1471 = vmatprep.mubr.f32.mxu0 %v72
    %1472 = vmatmul.mubr.f32.gmra.mrb[0].mxu0 %v71
    %v1473 = vpop.f32.mrb[0].mxu0
    %v1474 = vadd.f32 %v897, %v1473
    %v1475 = vpop.f32.mrb[0].mxu0
    %v1476 = vadd.f32 %v901, %v1475
    %1477 = vdwg.mxu0
    %1478 = vmatprep.subr.mxu0 %v215
    %1479 = vmatpush1.msra.mxu0 %v214
    %1480 = vmatprep.subr.mxu0 %v219
    %1481 = vmatpush1.msra.mxu0 %v218
    %1482 = vmatprep.subr.mxu0 %v223
    %1483 = vmatpush1.msra.mxu0 %v222
    %1484 = vmatprep.subr.mxu0 %v227
    %1485 = vmatpush1.msra.mxu0 %v226
    %1486 = vmatprep.subr.mxu0 %v231
    %1487 = vmatpush1.msra.mxu0 %v230
    %1488 = vmatprep.subr.mxu0 %v235
    %1489 = vmatpush1.msra.mxu0 %v234
    %1490 = vmatprep.subr.mxu0 %v239
    %1491 = vmatpush1.msra.mxu0 %v238
    %1492 = vmatprep.subr.mxu0 %v243
    %1493 = vmatpush1.msra.mxu0 %v242
    %1494 = vmatprep.subr.mxu0 %v247
    %1495 = vmatpush1.msra.mxu0 %v246
    %1496 = vmatprep.subr.mxu0 %v251
    %1497 = vmatpush1.msra.mxu0 %v250
    %1498 = vmatprep.subr.mxu0 %v255
    %1499 = vmatpush1.msra.mxu0 %v254
    %1500 = vmatprep.subr.mxu0 %v259
    %1501 = vmatpush1.msra.mxu0 %v258
    %1502 = vmatprep.subr.mxu0 %v263
    %1503 = vmatpush1.msra.mxu0 %v262
    %1504 = vmatprep.subr.mxu0 %v267
    %1505 = vmatpush1.msra.mxu0 %v266
    %1506 = vmatprep.subr.mxu0 %v271
    %1507 = vmatpush1.msra.mxu0 %v270
    %1508 = vmatprep.subr.mxu0 %v275
    %1509 = vmatpush1.msra.mxu0 %v274
    %1510 = vmatprep.subr.mxu0 %v279
    %1511 = vmatpush1.msra.mxu0 %v278
    %1512 = vmatprep.subr.mxu0 %v283
    %1513 = vmatpush1.msra.mxu0 %v282
    %1514 = vmatprep.subr.mxu0 %v287
    %1515 = vmatpush1.msra.mxu0 %v286
    %1516 = vmatprep.subr.mxu0 %v291
    %1517 = vmatpush1.msra.mxu0 %v290
    %1518 = vmatprep.subr.mxu0 %v295
    %1519 = vmatpush1.msra.mxu0 %v294
    %1520 = vmatprep.subr.mxu0 %v299
    %1521 = vmatpush1.msra.mxu0 %v298
    %1522 = vmatprep.subr.mxu0 %v303
    %1523 = vmatpush1.msra.mxu0 %v302
    %1524 = vmatprep.subr.mxu0 %v307
    %1525 = vmatpush1.msra.mxu0 %v306
    %1526 = vmatprep.subr.mxu0 %v311
    %1527 = vmatpush1.msra.mxu0 %v310
    %1528 = vmatprep.subr.mxu0 %v315
    %1529 = vmatpush1.msra.mxu0 %v314
    %1530 = vmatprep.subr.mxu0 %v319
    %1531 = vmatpush1.msra.mxu0 %v318
    %1532 = vmatprep.subr.mxu0 %v323
    %1533 = vmatpush1.msra.mxu0 %v322
    %1534 = vmatprep.subr.mxu0 %v327
    %1535 = vmatpush1.msra.mxu0 %v326
    %1536 = vmatprep.subr.mxu0 %v331
    %1537 = vmatpush1.msra.mxu0 %v330
    %1538 = vmatprep.subr.mxu0 %v335
    %1539 = vmatpush1.msra.mxu0 %v334
    %1540 = vmatprep.subr.mxu0 %v339
    %1541 = vmatpush1.msra.mxu0 %v338
    %1542 = vmatprep.mubr.f32.mxu0 %v74
    %1543 = vmatmul.mubr.f32.gmra.mrb[0].mxu0 %v73
    %v1544 = vpop.f32.mrb[0].mxu0
    %v1545 = vadd.f32 %v1474, %v1544
    %v1546 = vpop.f32.mrb[0].mxu0
    %v1547 = vadd.f32 %v1476, %v1546
    %1548 = vdwg.mxu0
    %1549 = vmatprep.subr.mxu0 %v343
    %1550 = vmatpush1.msra.mxu0 %v342
    %1551 = vmatprep.subr.mxu0 %v347
    %1552 = vmatpush1.msra.mxu0 %v346
    %1553 = vmatprep.subr.mxu0 %v351
    %1554 = vmatpush1.msra.mxu0 %v350
    %1555 = vmatprep.subr.mxu0 %v355
    %1556 = vmatpush1.msra.mxu0 %v354
    %1557 = vmatprep.subr.mxu0 %v359
    %1558 = vmatpush1.msra.mxu0 %v358
    %1559 = vmatprep.subr.mxu0 %v363
    %1560 = vmatpush1.msra.mxu0 %v362
    %1561 = vmatprep.subr.mxu0 %v367
    %1562 = vmatpush1.msra.mxu0 %v366
    %1563 = vmatprep.subr.mxu0 %v371
    %1564 = vmatpush1.msra.mxu0 %v370
    %1565 = vmatprep.subr.mxu0 %v375
    %1566 = vmatpush1.msra.mxu0 %v374
    %1567 = vmatprep.subr.mxu0 %v379
    %1568 = vmatpush1.msra.mxu0 %v378
    %1569 = vmatprep.subr.mxu0 %v383
    %1570 = vmatpush1.msra.mxu0 %v382
    %1571 = vmatprep.subr.mxu0 %v387
    %1572 = vmatpush1.msra.mxu0 %v386
    %1573 = vmatprep.subr.mxu0 %v391
    %1574 = vmatpush1.msra.mxu0 %v390
    %1575 = vmatprep.subr.mxu0 %v395
    %1576 = vmatpush1.msra.mxu0 %v394
    %1577 = vmatprep.subr.mxu0 %v399
    %1578 = vmatpush1.msra.mxu0 %v398
    %1579 = vmatprep.subr.mxu0 %v403
    %1580 = vmatpush1.msra.mxu0 %v402
    %1581 = vmatprep.subr.mxu0 %v407
    %1582 = vmatpush1.msra.mxu0 %v406
    %1583 = vmatprep.subr.mxu0 %v411
    %1584 = vmatpush1.msra.mxu0 %v410
    %1585 = vmatprep.subr.mxu0 %v415
    %1586 = vmatpush1.msra.mxu0 %v414
    %1587 = vmatprep.subr.mxu0 %v419
    %1588 = vmatpush1.msra.mxu0 %v418
    %1589 = vmatprep.subr.mxu0 %v423
    %1590 = vmatpush1.msra.mxu0 %v422
    %1591 = vmatprep.subr.mxu0 %v427
    %1592 = vmatpush1.msra.mxu0 %v426
    %1593 = vmatprep.subr.mxu0 %v431
    %1594 = vmatpush1.msra.mxu0 %v430
    %1595 = vmatprep.subr.mxu0 %v435
    %1596 = vmatpush1.msra.mxu0 %v434
    %1597 = vmatprep.subr.mxu0 %v439
    %1598 = vmatpush1.msra.mxu0 %v438
    %1599 = vmatprep.subr.mxu0 %v443
    %1600 = vmatpush1.msra.mxu0 %v442
    %1601 = vmatprep.subr.mxu0 %v447
    %1602 = vmatpush1.msra.mxu0 %v446
    %1603 = vmatprep.subr.mxu0 %v451
    %1604 = vmatpush1.msra.mxu0 %v450
    %1605 = vmatprep.subr.mxu0 %v455
    %1606 = vmatpush1.msra.mxu0 %v454
    %1607 = vmatprep.subr.mxu0 %v459
    %1608 = vmatpush1.msra.mxu0 %v458
    %1609 = vmatprep.subr.mxu0 %v463
    %1610 = vmatpush1.msra.mxu0 %v462
    %1611 = vmatprep.subr.mxu0 %v467
    %1612 = vmatpush1.msra.mxu0 %v466
    %1613 = vmatprep.mubr.f32.mxu0 %v76
    %1614 = vmatmul.mubr.f32.gmra.mrb[0].mxu0 %v75
    %v1615 = vpop.f32.mrb[0].mxu0
    %v1616 = vadd.f32 %v1545, %v1615
    %v1617 = vpop.f32.mrb[0].mxu0
    %v1618 = vadd.f32 %v1547, %v1617
    %1619 = vdwg.mxu0
    %1620 = vmatprep.subr.mxu0 %v471
    %1621 = vmatpush1.msra.mxu0 %v470
    %1622 = vmatprep.subr.mxu0 %v475
    %1623 = vmatpush1.msra.mxu0 %v474
    %1624 = vmatprep.subr.mxu0 %v479
    %1625 = vmatpush1.msra.mxu0 %v478
    %1626 = vmatprep.subr.mxu0 %v483
    %1627 = vmatpush1.msra.mxu0 %v482
    %1628 = vmatprep.subr.mxu0 %v487
    %1629 = vmatpush1.msra.mxu0 %v486
    %1630 = vmatprep.subr.mxu0 %v491
    %1631 = vmatpush1.msra.mxu0 %v490
    %1632 = vmatprep.subr.mxu0 %v495
    %1633 = vmatpush1.msra.mxu0 %v494
    %1634 = vmatprep.subr.mxu0 %v499
    %1635 = vmatpush1.msra.mxu0 %v498
    %1636 = vmatprep.subr.mxu0 %v503
    %1637 = vmatpush1.msra.mxu0 %v502
    %1638 = vmatprep.subr.mxu0 %v507
    %1639 = vmatpush1.msra.mxu0 %v506
    %1640 = vmatprep.subr.mxu0 %v511
    %1641 = vmatpush1.msra.mxu0 %v510
    %1642 = vmatprep.subr.mxu0 %v515
    %1643 = vmatpush1.msra.mxu0 %v514
    %1644 = vmatprep.subr.mxu0 %v519
    %1645 = vmatpush1.msra.mxu0 %v518
    %1646 = vmatprep.subr.mxu0 %v523
    %1647 = vmatpush1.msra.mxu0 %v522
    %1648 = vmatprep.subr.mxu0 %v527
    %1649 = vmatpush1.msra.mxu0 %v526
    %1650 = vmatprep.subr.mxu0 %v531
    %1651 = vmatpush1.msra.mxu0 %v530
    %1652 = vmatprep.subr.mxu0 %v535
    %1653 = vmatpush1.msra.mxu0 %v534
    %1654 = vmatprep.subr.mxu0 %v539
    %1655 = vmatpush1.msra.mxu0 %v538
    %1656 = vmatprep.subr.mxu0 %v543
    %1657 = vmatpush1.msra.mxu0 %v542
    %1658 = vmatprep.subr.mxu0 %v547
    %1659 = vmatpush1.msra.mxu0 %v546
    %1660 = vmatprep.subr.mxu0 %v551
    %1661 = vmatpush1.msra.mxu0 %v550
    %1662 = vmatprep.subr.mxu0 %v555
    %1663 = vmatpush1.msra.mxu0 %v554
    %1664 = vmatprep.subr.mxu0 %v559
    %1665 = vmatpush1.msra.mxu0 %v558
    %1666 = vmatprep.subr.mxu0 %v563
    %1667 = vmatpush1.msra.mxu0 %v562
    %1668 = vmatprep.subr.mxu0 %v567
    %1669 = vmatpush1.msra.mxu0 %v566
    %1670 = vmatprep.subr.mxu0 %v571
    %1671 = vmatpush1.msra.mxu0 %v570
    %1672 = vmatprep.subr.mxu0 %v575
    %1673 = vmatpush1.msra.mxu0 %v574
    %1674 = vmatprep.subr.mxu0 %v579
    %1675 = vmatpush1.msra.mxu0 %v578
    %1676 = vmatprep.subr.mxu0 %v583
    %1677 = vmatpush1.msra.mxu0 %v582
    %1678 = vmatprep.subr.mxu0 %v587
    %1679 = vmatpush1.msra.mxu0 %v586
    %1680 = vmatprep.subr.mxu0 %v591
    %1681 = vmatpush1.msra.mxu0 %v590
    %1682 = vmatprep.subr.mxu0 %v595
    %1683 = vmatpush1.msra.mxu0 %v594
    %1684 = vmatprep.mubr.f32.mxu0 %v78
    %1685 = vmatmul.mubr.f32.gmra.mrb[0].mxu0 %v77
    %v1686 = vpop.f32.mrb[0].mxu0
    %v1687 = vadd.f32 %v1616, %v1686
    %v1688 = vpop.f32.mrb[0].mxu0
    %v1689 = vadd.f32 %v1618, %v1688
    %1690 = vdwg.mxu0
    %1691 = vmatprep.subr.mxu0 %v599
    %1692 = vmatpush1.msra.mxu0 %v598
    %1693 = vmatprep.subr.mxu0 %v603
    %1694 = vmatpush1.msra.mxu0 %v602
    %1695 = vmatprep.subr.mxu0 %v607
    %1696 = vmatpush1.msra.mxu0 %v606
    %1697 = vmatprep.subr.mxu0 %v611
    %1698 = vmatpush1.msra.mxu0 %v610
    %1699 = vmatprep.subr.mxu0 %v615
    %1700 = vmatpush1.msra.mxu0 %v614
    %1701 = vmatprep.subr.mxu0 %v619
    %1702 = vmatpush1.msra.mxu0 %v618
    %1703 = vmatprep.subr.mxu0 %v623
    %1704 = vmatpush1.msra.mxu0 %v622
    %1705 = vmatprep.subr.mxu0 %v627
    %1706 = vmatpush1.msra.mxu0 %v626
    %1707 = vmatprep.subr.mxu0 %v631
    %1708 = vmatpush1.msra.mxu0 %v630
    %1709 = vmatprep.subr.mxu0 %v635
    %1710 = vmatpush1.msra.mxu0 %v634
    %1711 = vmatprep.subr.mxu0 %v639
    %1712 = vmatpush1.msra.mxu0 %v638
    %1713 = vmatprep.subr.mxu0 %v643
    %1714 = vmatpush1.msra.mxu0 %v642
    %1715 = vmatprep.subr.mxu0 %v647
    %1716 = vmatpush1.msra.mxu0 %v646
    %1717 = vmatprep.subr.mxu0 %v651
    %1718 = vmatpush1.msra.mxu0 %v650
    %1719 = vmatprep.subr.mxu0 %v655
    %1720 = vmatpush1.msra.mxu0 %v654
    %1721 = vmatprep.subr.mxu0 %v659
    %1722 = vmatpush1.msra.mxu0 %v658
    %1723 = vmatprep.subr.mxu0 %v663
    %1724 = vmatpush1.msra.mxu0 %v662
    %1725 = vmatprep.subr.mxu0 %v667
    %1726 = vmatpush1.msra.mxu0 %v666
    %1727 = vmatprep.subr.mxu0 %v671
    %1728 = vmatpush1.msra.mxu0 %v670
    %1729 = vmatprep.subr.mxu0 %v675
    %1730 = vmatpush1.msra.mxu0 %v674
    %1731 = vmatprep.subr.mxu0 %v679
    %1732 = vmatpush1.msra.mxu0 %v678
    %1733 = vmatprep.subr.mxu0 %v683
    %1734 = vmatpush1.msra.mxu0 %v682
    %1735 = vmatprep.subr.mxu0 %v687
    %1736 = vmatpush1.msra.mxu0 %v686
    %1737 = vmatprep.subr.mxu0 %v691
    %1738 = vmatpush1.msra.mxu0 %v690
    %1739 = vmatprep.subr.mxu0 %v695
    %1740 = vmatpush1.msra.mxu0 %v694
    %1741 = vmatprep.subr.mxu0 %v699
    %1742 = vmatpush1.msra.mxu0 %v698
    %1743 = vmatprep.subr.mxu0 %v703
    %1744 = vmatpush1.msra.mxu0 %v702
    %1745 = vmatprep.subr.mxu0 %v707
    %1746 = vmatpush1.msra.mxu0 %v706
    %1747 = vmatprep.subr.mxu0 %v711
    %1748 = vmatpush1.msra.mxu0 %v710
    %1749 = vmatprep.subr.mxu0 %v715
    %1750 = vmatpush1.msra.mxu0 %v714
    %1751 = vmatprep.subr.mxu0 %v719
    %1752 = vmatpush1.msra.mxu0 %v718
    %1753 = vmatprep.subr.mxu0 %v723
    %1754 = vmatpush1.msra.mxu0 %v722
    %1755 = vmatprep.mubr.f32.mxu0 %v80
    %1756 = vmatmul.mubr.f32.gmra.mrb[0].mxu0 %v79
    %v1757 = vpop.f32.mrb[0].mxu0
    %v1758 = vadd.f32 %v1687, %v1757
    %v1759 = vpop.f32.mrb[0].mxu0
    %v1760 = vadd.f32 %v1689, %v1759
    %1761 = vdwg.mxu0
    %1762 = vmatprep.subr.mxu0 %v727
    %1763 = vmatpush1.msra.mxu0 %v726
    %1764 = vmatprep.subr.mxu0 %v731
    %1765 = vmatpush1.msra.mxu0 %v730
    %1766 = vmatprep.subr.mxu0 %v735
    %1767 = vmatpush1.msra.mxu0 %v734
    %1768 = vmatprep.subr.mxu0 %v739
    %1769 = vmatpush1.msra.mxu0 %v738
    %1770 = vmatprep.subr.mxu0 %v743
    %1771 = vmatpush1.msra.mxu0 %v742
    %1772 = vmatprep.subr.mxu0 %v747
    %1773 = vmatpush1.msra.mxu0 %v746
    %1774 = vmatprep.subr.mxu0 %v751
    %1775 = vmatpush1.msra.mxu0 %v750
    %1776 = vmatprep.subr.mxu0 %v755
    %1777 = vmatpush1.msra.mxu0 %v754
    %1778 = vmatprep.subr.mxu0 %v759
    %1779 = vmatpush1.msra.mxu0 %v758
    %1780 = vmatprep.subr.mxu0 %v763
    %1781 = vmatpush1.msra.mxu0 %v762
    %1782 = vmatprep.subr.mxu0 %v767
    %1783 = vmatpush1.msra.mxu0 %v766
    %1784 = vmatprep.subr.mxu0 %v771
    %1785 = vmatpush1.msra.mxu0 %v770
    %1786 = vmatprep.subr.mxu0 %v775
    %1787 = vmatpush1.msra.mxu0 %v774
    %1788 = vmatprep.subr.mxu0 %v779
    %1789 = vmatpush1.msra.mxu0 %v778
    %1790 = vmatprep.subr.mxu0 %v783
    %1791 = vmatpush1.msra.mxu0 %v782
    %1792 = vmatprep.subr.mxu0 %v787
    %1793 = vmatpush1.msra.mxu0 %v786
    %1794 = vmatprep.subr.mxu0 %v791
    %1795 = vmatpush1.msra.mxu0 %v790
    %1796 = vmatprep.subr.mxu0 %v795
    %1797 = vmatpush1.msra.mxu0 %v794
    %1798 = vmatprep.subr.mxu0 %v799
    %1799 = vmatpush1.msra.mxu0 %v798
    %1800 = vmatprep.subr.mxu0 %v803
    %1801 = vmatpush1.msra.mxu0 %v802
    %1802 = vmatprep.subr.mxu0 %v807
    %1803 = vmatpush1.msra.mxu0 %v806
    %1804 = vmatprep.subr.mxu0 %v811
    %1805 = vmatpush1.msra.mxu0 %v810
    %1806 = vmatprep.subr.mxu0 %v815
    %1807 = vmatpush1.msra.mxu0 %v814
    %1808 = vmatprep.subr.mxu0 %v819
    %1809 = vmatpush1.msra.mxu0 %v818
    %1810 = vmatprep.subr.mxu0 %v823
    %1811 = vmatpush1.msra.mxu0 %v822
    %1812 = vmatprep.subr.mxu0 %v827
    %1813 = vmatpush1.msra.mxu0 %v826
    %1814 = vmatprep.subr.mxu0 %v831
    %1815 = vmatpush1.msra.mxu0 %v830
    %1816 = vmatprep.subr.mxu0 %v835
    %1817 = vmatpush1.msra.mxu0 %v834
    %1818 = vmatprep.subr.mxu0 %v839
    %1819 = vmatpush1.msra.mxu0 %v838
    %1820 = vmatprep.subr.mxu0 %v843
    %1821 = vmatpush1.msra.mxu0 %v842
    %1822 = vmatprep.subr.mxu0 %v847
    %1823 = vmatpush1.msra.mxu0 %v846
    %1824 = vmatprep.subr.mxu0 %v851
    %1825 = vmatpush1.msra.mxu0 %v850
    %1826 = vmatprep.mubr.f32.mxu0 %v82
    %1827 = vmatmul.mubr.f32.gmra.mrb[0].mxu0 %v81
    %v1828 = vpop.f32.mrb[0].mxu0
    %v1829 = vadd.f32 %v1758, %v1828
    %v1830 = vpop.f32.mrb[0].mxu0
    %v1831 = vadd.f32 %v1760, %v1830
    %1832 = vdwg.mxu0
    %1833 = vmatprep.subr.mxu0 %v855
    %1834 = vmatpush1.msra.mxu0 %v854
    %1835 = vmatprep.subr.mxu0 %v859
    %1836 = vmatpush1.msra.mxu0 %v858
    %1837 = vmatprep.subr.mxu0 %v863
    %1838 = vmatpush1.msra.mxu0 %v862
    %1839 = vmatprep.subr.mxu0 %v867
    %1840 = vmatpush1.msra.mxu0 %v866
    %1841 = vmatprep.subr.mxu0 %v871
    %1842 = vmatpush1.msra.mxu0 %v870
    %1843 = vmatprep.subr.mxu0 %v875
    %1844 = vmatpush1.msra.mxu0 %v874
    %1845 = vmatprep.subr.mxu0 %v879
    %1846 = vmatpush1.msra.mxu0 %v878
    %1847 = vmatprep.subr.mxu0 %v883
    %1848 = vmatpush1.msra.mxu0 %v882
    %1849 = vmatprep.subr.mxu0 0.0
    %1850 = vmatpush1.msra.mxu0 0.0
    %1851 = vmatprep.subr.mxu0 0.0
    %1852 = vmatpush1.msra.mxu0 0.0
    %1853 = vmatprep.subr.mxu0 0.0
    %1854 = vmatpush1.msra.mxu0 0.0
    %1855 = vmatprep.subr.mxu0 0.0
    %1856 = vmatpush1.msra.mxu0 0.0
    %1857 = vmatprep.subr.mxu0 0.0
    %1858 = vmatpush1.msra.mxu0 0.0
    %1859 = vmatprep.subr.mxu0 0.0
    %1860 = vmatpush1.msra.mxu0 0.0
    %1861 = vmatprep.subr.mxu0 0.0
    %1862 = vmatpush1.msra.mxu0 0.0
    %1863 = vmatprep.subr.mxu0 0.0
    %1864 = vmatpush1.msra.mxu0 0.0
    %1865 = vmatprep.subr.mxu0 0.0
    %1866 = vmatpush1.msra.mxu0 0.0
    %1867 = vmatprep.subr.mxu0 0.0
    %1868 = vmatpush1.msra.mxu0 0.0
    %1869 = vmatprep.subr.mxu0 0.0
    %1870 = vmatpush1.msra.mxu0 0.0
    %1871 = vmatprep.subr.mxu0 0.0
    %1872 = vmatpush1.msra.mxu0 0.0
    %1873 = vmatprep.subr.mxu0 0.0
    %1874 = vmatpush1.msra.mxu0 0.0
    %1875 = vmatprep.subr.mxu0 0.0
    %1876 = vmatpush1.msra.mxu0 0.0
    %1877 = vmatprep.subr.mxu0 0.0
    %1878 = vmatpush1.msra.mxu0 0.0
    %1879 = vmatprep.subr.mxu0 0.0
    %1880 = vmatpush1.msra.mxu0 0.0
    %1881 = vmatprep.subr.mxu0 0.0
    %1882 = vmatpush1.msra.mxu0 0.0
    %1883 = vmatprep.subr.mxu0 0.0
    %1884 = vmatpush1.msra.mxu0 0.0
    %1885 = vmatprep.subr.mxu0 0.0
    %1886 = vmatpush1.msra.mxu0 0.0
    %1887 = vmatprep.subr.mxu0 0.0
    %1888 = vmatpush1.msra.mxu0 0.0
    %1889 = vmatprep.subr.mxu0 0.0
    %1890 = vmatpush1.msra.mxu0 0.0
    %1891 = vmatprep.subr.mxu0 0.0
    %1892 = vmatpush1.msra.mxu0 0.0
    %1893 = vmatprep.subr.mxu0 0.0
    %1894 = vmatpush1.msra.mxu0 0.0
    %1895 = vmatprep.subr.mxu0 0.0
    %1896 = vmatpush1.msra.mxu0 0.0
    %1897 = vmatprep.mubr.f32.mxu0 0.0
    %1898 = vmatmul.mubr.f32.gmra.mrb[0].mxu0 %v908
    %v1899 = vpop.f32.mrb[0].mxu0
    %v1900 = vadd.f32 %v1829, %v1899
    %v1901 = vpop.f32.mrb[0].mxu0
    %v1902 = vadd.f32 %v1831, %v1901
    %1903 = vdwg.mxu0
    %vm1904 = vcmp.gt.f32.partialorder %v1403, 0.0
    %vm1905 = vcmp.gt.f32.partialorder %v1405, 0.0
    %vm1906 = vcmp.gt.f32.partialorder %v1900, 0.0
    %vm1907 = vcmp.gt.f32.partialorder %v1902, 0.0
    %v1908 = vmul.f32 %v1403, 0.01
    %v1909 = vmul.f32 %v1405, 0.01
    %v1910 = vmul.f32 %v1900, 0.01
    %v1911 = vmul.f32 %v1902, 0.01
    %v1912 = vsel %vm1904, %v1403, %v1908
    %v1913 = vsel %vm1905, %v1405, %v1909
    %v1914 = vsel %vm1906, %v1900, %v1910
    %v1915 = vsel %vm1907, %v1902, %v1911
    %v1916 = vld [vmem:[#allocation6] sm:$0xff]
    %v1917 = vld [vmem:[#allocation6 + $0x8] sm:$0xff]
    %v1918 = vld [vmem:[#allocation6 + $0x10] sm:$0xff]
    %v1919 = vld [vmem:[#allocation6 + $0x18] sm:$0xff]
    %v1920 = vld [vmem:[#allocation6 + $0x20] sm:$0xff]
    %v1921 = vld [vmem:[#allocation6 + $0x28] sm:$0xff]
    %v1922 = vld [vmem:[#allocation6 + $0x30] sm:$0xff]
    %v1923 = vld [vmem:[#allocation6 + $0x38] sm:$0xff]
    %v1924 = vld [vmem:[#allocation6 + $0x40] sm:$0xff]
    %v1925 = vld [vmem:[#allocation6 + $0x48] sm:$0xff]
    %v1926 = vld [vmem:[#allocation6 + $0x50] sm:$0xff]
    %v1927 = vld [vmem:[#allocation6 + $0x58] sm:$0xff]
    %v1928 = vld [vmem:[#allocation6 + $0x60] sm:$0xff]
    %v1929 = vld [vmem:[#allocation6 + $0x68] sm:$0xff]
    %v1930 = vld [vmem:[#allocation6 + $0x70] sm:$0xff]
    %v1931 = vld [vmem:[#allocation6 + $0x78] sm:$0xff]
    %v1932 = vld [vmem:[#allocation6 + $0x80] sm:$0xff]
    %v1933 = vld [vmem:[#allocation6 + $0x88] sm:$0xff]
    %v1934 = vld [vmem:[#allocation6 + $0x90] sm:$0xff]
    %v1935 = vld [vmem:[#allocation6 + $0x98] sm:$0xff]
    %v1936 = vld [vmem:[#allocation6 + $0xa0] sm:$0xff]
    %v1937 = vld [vmem:[#allocation6 + $0xa8] sm:$0xff]
    %v1938 = vld [vmem:[#allocation6 + $0xb0] sm:$0xff]
    %v1939 = vld [vmem:[#allocation6 + $0xb8] sm:$0xff]
    %v1940 = vld [vmem:[#allocation6 + $0xc0] sm:$0xff]
    %v1941 = vld [vmem:[#allocation6 + $0xc8] sm:$0xff]
    %v1942 = vld [vmem:[#allocation6 + $0xd0] sm:$0xff]
    %v1943 = vld [vmem:[#allocation6 + $0xd8] sm:$0xff]
    %v1944 = vld [vmem:[#allocation6 + $0xe0] sm:$0xff]
    %v1945 = vld [vmem:[#allocation6 + $0xe8] sm:$0xff]
    %v1946 = vld [vmem:[#allocation6 + $0xf0] sm:$0xff]
    %v1947 = vld [vmem:[#allocation6 + $0xf8] sm:$0xff]
    %v1948 = vld [vmem:[#allocation6 + $0x100] sm:$0xff]
    %v1949 = vld [vmem:[#allocation6 + $0x108] sm:$0xff]
    %v1950 = vld [vmem:[#allocation6 + $0x110] sm:$0xff]
    %v1951 = vld [vmem:[#allocation6 + $0x118] sm:$0xff]
    %v1952 = vld [vmem:[#allocation6 + $0x120] sm:$0xff]
    %v1953 = vld [vmem:[#allocation6 + $0x128] sm:$0xff]
    %v1954 = vld [vmem:[#allocation6 + $0x130] sm:$0xff]
    %v1955 = vld [vmem:[#allocation6 + $0x138] sm:$0xff]
    %v1956 = vld [vmem:[#allocation6 + $0x140] sm:$0xff]
    %v1957 = vld [vmem:[#allocation6 + $0x148] sm:$0xff]
    %v1958 = vld [vmem:[#allocation6 + $0x150] sm:$0xff]
    %v1959 = vld [vmem:[#allocation6 + $0x158] sm:$0xff]
    %v1960 = vld [vmem:[#allocation6 + $0x160] sm:$0xff]
    %v1961 = vld [vmem:[#allocation6 + $0x168] sm:$0xff]
    %v1962 = vld [vmem:[#allocation6 + $0x170] sm:$0xff]
    %v1963 = vld [vmem:[#allocation6 + $0x178] sm:$0xff]
    %v1964 = vld [vmem:[#allocation6 + $0x180] sm:$0xff]
    %v1965 = vld [vmem:[#allocation6 + $0x188] sm:$0xff]
    %v1966 = vld [vmem:[#allocation6 + $0x190] sm:$0xff]
    %v1967 = vld [vmem:[#allocation6 + $0x198] sm:$0xff]
    %v1968 = vld [vmem:[#allocation6 + $0x1a0] sm:$0xff]
    %v1969 = vld [vmem:[#allocation6 + $0x1a8] sm:$0xff]
    %v1970 = vld [vmem:[#allocation6 + $0x1b0] sm:$0xff]
    %v1971 = vld [vmem:[#allocation6 + $0x1b8] sm:$0xff]
    %v1972 = vld [vmem:[#allocation6 + $0x1c0] sm:$0xff]
    %v1973 = vld [vmem:[#allocation6 + $0x1c8] sm:$0xff]
    %v1974 = vld [vmem:[#allocation6 + $0x1d0] sm:$0xff]
    %v1975 = vld [vmem:[#allocation6 + $0x1d8] sm:$0xff]
    %v1976 = vld [vmem:[#allocation6 + $0x1e0] sm:$0xff]
    %v1977 = vld [vmem:[#allocation6 + $0x1e8] sm:$0xff]
    %v1978 = vld [vmem:[#allocation6 + $0x1f0] sm:$0xff]
    %v1979 = vld [vmem:[#allocation6 + $0x1f8] sm:$0xff]
    %v1980 = vld [vmem:[#allocation7] sm:$0x1]
    %v1982 = vlaneseq
    %v1983 = vshrl.u32 %v1982, 7
    %v1984 = vsub.s32 0, %v1983
    %v1985 = vrot.slane %v1980, %v1984
    %1987 = vmatprep.subr.mxu0 0.0
    %1988 = vmatpush1.msra.mxu0 %v1916
    %1989 = vmatprep.subr.mxu0 0.0
    %1990 = vmatpush1.msra.mxu0 %v1917
    %1991 = vmatprep.subr.mxu0 0.0
    %1992 = vmatpush1.msra.mxu0 %v1918
    %1993 = vmatprep.subr.mxu0 0.0
    %1994 = vmatpush1.msra.mxu0 %v1919
    %1995 = vmatprep.subr.mxu0 0.0
    %1996 = vmatpush1.msra.mxu0 %v1920
    %1997 = vmatprep.subr.mxu0 0.0
    %1998 = vmatpush1.msra.mxu0 %v1921
    %1999 = vmatprep.subr.mxu0 0.0
    %2000 = vmatpush1.msra.mxu0 %v1922
    %2001 = vmatprep.subr.mxu0 0.0
    %2002 = vmatpush1.msra.mxu0 %v1923
    %2003 = vmatprep.subr.mxu0 0.0
    %2004 = vmatpush1.msra.mxu0 %v1924
    %2005 = vmatprep.subr.mxu0 0.0
    %2006 = vmatpush1.msra.mxu0 %v1925
    %2007 = vmatprep.subr.mxu0 0.0
    %2008 = vmatpush1.msra.mxu0 %v1926
    %2009 = vmatprep.subr.mxu0 0.0
    %2010 = vmatpush1.msra.mxu0 %v1927
    %2011 = vmatprep.subr.mxu0 0.0
    %2012 = vmatpush1.msra.mxu0 %v1928
    %2013 = vmatprep.subr.mxu0 0.0
    %2014 = vmatpush1.msra.mxu0 %v1929
    %2015 = vmatprep.subr.mxu0 0.0
    %2016 = vmatpush1.msra.mxu0 %v1930
    %2017 = vmatprep.subr.mxu0 0.0
    %2018 = vmatpush1.msra.mxu0 %v1931
    %2019 = vmatprep.subr.mxu0 0.0
    %2020 = vmatpush1.msra.mxu0 %v1932
    %2021 = vmatprep.subr.mxu0 0.0
    %2022 = vmatpush1.msra.mxu0 %v1933
    %2023 = vmatprep.subr.mxu0 0.0
    %2024 = vmatpush1.msra.mxu0 %v1934
    %2025 = vmatprep.subr.mxu0 0.0
    %2026 = vmatpush1.msra.mxu0 %v1935
    %2027 = vmatprep.subr.mxu0 0.0
    %2028 = vmatpush1.msra.mxu0 %v1936
    %2029 = vmatprep.subr.mxu0 0.0
    %2030 = vmatpush1.msra.mxu0 %v1937
    %2031 = vmatprep.subr.mxu0 0.0
    %2032 = vmatpush1.msra.mxu0 %v1938
    %2033 = vmatprep.subr.mxu0 0.0
    %2034 = vmatpush1.msra.mxu0 %v1939
    %2035 = vmatprep.subr.mxu0 0.0
    %2036 = vmatpush1.msra.mxu0 %v1940
    %2037 = vmatprep.subr.mxu0 0.0
    %2038 = vmatpush1.msra.mxu0 %v1941
    %2039 = vmatprep.subr.mxu0 0.0
    %2040 = vmatpush1.msra.mxu0 %v1942
    %2041 = vmatprep.subr.mxu0 0.0
    %2042 = vmatpush1.msra.mxu0 %v1943
    %2043 = vmatprep.subr.mxu0 0.0
    %2044 = vmatpush1.msra.mxu0 %v1944
    %2045 = vmatprep.subr.mxu0 0.0
    %2046 = vmatpush1.msra.mxu0 %v1945
    %2047 = vmatprep.subr.mxu0 0.0
    %2048 = vmatpush1.msra.mxu0 %v1946
    %2049 = vmatprep.subr.mxu0 0.0
    %2050 = vmatpush1.msra.mxu0 %v1947
    %2051 = vmatprep.mubr.f32.mxu0 %v1913
    %2052 = vmatmul.mubr.f32.gmra.mrb[0].mxu0 %v1912
    %v2053 = vpop.f32.mrb[0].mxu0
    %v2054 = vadd.f32 %v1985, %v2053
    %v2055 = vpop.f32.mrb[0].mxu0
    %2056 = vdwg.mxu0
    %2057 = vmatprep.subr.mxu0 0.0
    %2058 = vmatpush1.msra.mxu0 %v1948
    %2059 = vmatprep.subr.mxu0 0.0
    %2060 = vmatpush1.msra.mxu0 %v1949
    %2061 = vmatprep.subr.mxu0 0.0
    %2062 = vmatpush1.msra.mxu0 %v1950
    %2063 = vmatprep.subr.mxu0 0.0
    %2064 = vmatpush1.msra.mxu0 %v1951
    %2065 = vmatprep.subr.mxu0 0.0
    %2066 = vmatpush1.msra.mxu0 %v1952
    %2067 = vmatprep.subr.mxu0 0.0
    %2068 = vmatpush1.msra.mxu0 %v1953
    %2069 = vmatprep.subr.mxu0 0.0
    %2070 = vmatpush1.msra.mxu0 %v1954
    %2071 = vmatprep.subr.mxu0 0.0
    %2072 = vmatpush1.msra.mxu0 %v1955
    %2073 = vmatprep.subr.mxu0 0.0
    %2074 = vmatpush1.msra.mxu0 %v1956
    %2075 = vmatprep.subr.mxu0 0.0
    %2076 = vmatpush1.msra.mxu0 %v1957
    %2077 = vmatprep.subr.mxu0 0.0
    %2078 = vmatpush1.msra.mxu0 %v1958
    %2079 = vmatprep.subr.mxu0 0.0
    %2080 = vmatpush1.msra.mxu0 %v1959
    %2081 = vmatprep.subr.mxu0 0.0
    %2082 = vmatpush1.msra.mxu0 %v1960
    %2083 = vmatprep.subr.mxu0 0.0
    %2084 = vmatpush1.msra.mxu0 %v1961
    %2085 = vmatprep.subr.mxu0 0.0
    %2086 = vmatpush1.msra.mxu0 %v1962
    %2087 = vmatprep.subr.mxu0 0.0
    %2088 = vmatpush1.msra.mxu0 %v1963
    %2089 = vmatprep.subr.mxu0 0.0
    %2090 = vmatpush1.msra.mxu0 %v1964
    %2091 = vmatprep.subr.mxu0 0.0
    %2092 = vmatpush1.msra.mxu0 %v1965
    %2093 = vmatprep.subr.mxu0 0.0
    %2094 = vmatpush1.msra.mxu0 %v1966
    %2095 = vmatprep.subr.mxu0 0.0
    %2096 = vmatpush1.msra.mxu0 %v1967
    %2097 = vmatprep.subr.mxu0 0.0
    %2098 = vmatpush1.msra.mxu0 %v1968
    %2099 = vmatprep.subr.mxu0 0.0
    %2100 = vmatpush1.msra.mxu0 %v1969
    %2101 = vmatprep.subr.mxu0 0.0
    %2102 = vmatpush1.msra.mxu0 %v1970
    %2103 = vmatprep.subr.mxu0 0.0
    %2104 = vmatpush1.msra.mxu0 %v1971
    %2105 = vmatprep.subr.mxu0 0.0
    %2106 = vmatpush1.msra.mxu0 %v1972
    %2107 = vmatprep.subr.mxu0 0.0
    %2108 = vmatpush1.msra.mxu0 %v1973
    %2109 = vmatprep.subr.mxu0 0.0
    %2110 = vmatpush1.msra.mxu0 %v1974
    %2111 = vmatprep.subr.mxu0 0.0
    %2112 = vmatpush1.msra.mxu0 %v1975
    %2113 = vmatprep.subr.mxu0 0.0
    %2114 = vmatpush1.msra.mxu0 %v1976
    %2115 = vmatprep.subr.mxu0 0.0
    %2116 = vmatpush1.msra.mxu0 %v1977
    %2117 = vmatprep.subr.mxu0 0.0
    %2118 = vmatpush1.msra.mxu0 %v1978
    %2119 = vmatprep.subr.mxu0 0.0
    %2120 = vmatpush1.msra.mxu0 %v1979
    %2121 = vmatprep.mubr.f32.mxu0 %v1915
    %2122 = vmatmul.mubr.f32.gmra.mrb[0].mxu0 %v1914
    %v2123 = vpop.f32.mrb[0].mxu0
    %v2124 = vadd.f32 %v2054, %v2123
    %v2125 = vpop.f32.mrb[0].mxu0
    %2126 = vdwg.mxu0
    %2127 = vst [vmem:[%s5] sm:$0xff] %v2124
    // Predicated region
    $region38: #{mine_forward.1} parent=1 // pred_check
      _
    $region39: #{mine_forward.1} parent=1 // pred_check_branch
      %2129 = sbr.rel (0) target = $region41
    $region40: #{mine_forward.1} parent=1 // pred_region
      _
    $region41: #{mine_forward.1} parent=1 // pred_fallthru
      _
    // Predicated region
    $region42: #{mine_forward.1} parent=1 // pred_check
      _
    $region43: #{mine_forward.1} parent=1 // pred_check_branch
      %2131 = sbr.rel (0) target = $region45
    $region44: #{mine_forward.1} parent=1 // pred_region
      _
    $region45: #{mine_forward.1} parent=1 // pred_fallthru
      _
    %2132 = vsyncpa [#allocation3], 1
    %2133 = vsyncpa [#allocation5], 1
    %2134 = vsyncpa [#allocation8], 1

</llo_original>
